<compile_context>
chip_gen: v5e
topology: v5e:2x2
jax: 0.10.0
libtpu: 0.0.40
codegen_flags: <defaults>
</compile_context>

<pallas_src>
import functools

import numpy as np
import jax
import jax.numpy as jnp
from jax.experimental import pallas as pl
from jax.experimental.pallas import tpu as pltpu

PAD = 128  # lane-dense padded width for features / latents / head outputs


# ----------------------------------------------------------------------------
# Kernel 1: backbone (1x1 conv + bias + ReLU) fused with the per-image mean pool
# ----------------------------------------------------------------------------
def _backbone_pool_kernel(x_ref, w_ref, b_ref, o_ref, *, hw):
    # x: (img_blk*hw, Cin) bf16 ; w: (Cin, PAD) bf16 ; b: (1, PAD) f32
    # o: (1, img_blk, PAD) f32  -- mean over the hw pixel rows of each image
    y = jnp.dot(x_ref[...], w_ref[...], preferred_element_type=jnp.float32)
    y = jnp.maximum(y + b_ref[...], 0.0)                     # f32 elementwise
    img_blk = o_ref.shape[1]
    o_ref[0] = jnp.mean(y.reshape(img_blk, hw, y.shape[-1]), axis=1)


def _pick_img_block(n_img, hw, max_rows=2048):
    # largest divisor of n_img whose row count stays in the ~1-2K row sweet spot
    best = 1
    for d in range(1, n_img + 1):
        if n_img % d == 0 and d * hw <= max(max_rows, hw):
            best = d
    return best


def backbone_pool_apply(x2d, w, b, *, n_img, hw):
    """x2d: (n_img*hw, Cin) bf16 -> pooled features (n_img, PAD) f32."""
    c = x2d.shape[1]
    fp = w.shape[1]
    img_blk = _pick_img_block(n_img, hw)
    n_blocks = n_img // img_blk
    rows_blk = img_blk * hw
    out = pl.pallas_call(
        functools.partial(_backbone_pool_kernel, hw=hw),
        grid=(n_blocks,),
        in_specs=[
            pl.BlockSpec((rows_blk, c), lambda i: (i, 0)),
            pl.BlockSpec((c, fp), lambda i: (0, 0)),
            pl.BlockSpec((1, fp), lambda i: (0, 0)),
        ],
        out_specs=pl.BlockSpec((1, img_blk, fp), lambda i: (i, 0, 0)),
        out_shape=jax.ShapeDtypeStruct((n_blocks, img_blk, fp), jnp.float32),
        compiler_params=pltpu.CompilerParams(
            dimension_semantics=("parallel",),
            vmem_limit_bytes=64 * 1024 * 1024,
        ),
    )(x2d, w, b)
    return out.reshape(n_img, fp)


# ----------------------------------------------------------------------------
# Kernel 2: full recurrent chain over (T, V) + fused detection head
# ----------------------------------------------------------------------------
def _recurrent_head_kernel(sid_ref, x_ref, wh_ref, wx_ref, emb_ref, init_ref,
                           wo_ref, bo_ref, out_ref, h_ref, *, num_classes):
    t = pl.program_id(0)
    v = pl.program_id(1)
    n_lat, dpad = init_ref.shape
    bsz = h_ref.shape[0] // n_lat

    # initialize resident latents once, before the very first view update
    @pl.when(jnp.logical_and(t == 0, v == 0))
    def _():
        h_ref[...] = jnp.tile(init_ref[...], (bsz, 1))

    x = x_ref[0, 0]                                           # (B, PAD) f32
    xx = jnp.dot(x.astype(jnp.bfloat16), wx_ref[...],         # Wx once per batch
                 preferred_element_type=jnp.float32)          # (B, PAD)
    h = h_ref[...]                                            # (B*L, PAD) f32
    hh = jnp.dot(h.astype(jnp.bfloat16), wh_ref[...],
                 preferred_element_type=jnp.float32)          # (B*L, PAD)
    pre = hh.reshape(bsz, n_lat, dpad) + xx[:, None, :] + emb_ref[...]
    h_new = jnp.tanh(pre).reshape(bsz * n_lat, dpad)          # f32 elementwise
    h_ref[...] = h_new

    # detection head after the last view of this timestamp (q = hs)
    @pl.when(v == pl.num_programs(1) - 1)
    def _():
        y = jnp.dot(h_new.astype(jnp.bfloat16), wo_ref[...],
                    preferred_element_type=jnp.float32) + bo_ref[...]  # (B*L, PAD)
        col = jax.lax.broadcasted_iota(jnp.int32, y.shape, 1)
        is_pt = jnp.logical_and(col >= num_classes, col < num_classes + 2)
        out_ref[0] = jnp.where(is_pt, jax.nn.sigmoid(y), y)


def recurrent_head_apply(x_feat, sensor_ids, wh, wx, emb, init, wo, bo, *,
                         num_classes):
    """x_feat: (T, V, B, PAD) pooled+masked features; returns (T, B*L, PAD)."""
    T, V, B, fp = x_feat.shape
    L, dpad = init.shape

    grid_spec = pltpu.PrefetchScalarGridSpec(
        num_scalar_prefetch=1,                 # sensor ids in SMEM
        grid=(T, V),
        in_specs=[
            pl.BlockSpec((1, 1, B, fp), lambda t, v, sid: (t, v, 0, 0)),
            pl.BlockSpec(wh.shape, lambda t, v, sid: (0, 0)),
            pl.BlockSpec(wx.shape, lambda t, v, sid: (0, 0)),
            # embedding row chosen by the prefetched sensor id
            pl.BlockSpec((1, 1, dpad), lambda t, v, sid: (sid[t * V + v], 0, 0)),
            pl.BlockSpec(init.shape, lambda t, v, sid: (0, 0)),
            pl.BlockSpec(wo.shape, lambda t, v, sid: (0, 0)),
            pl.BlockSpec(bo.shape, lambda t, v, sid: (0, 0)),
        ],
        out_specs=pl.BlockSpec((1, B * L, PAD), lambda t, v, sid: (t, 0, 0)),
        scratch_shapes=[pltpu.VMEM((B * L, dpad), jnp.float32)],  # resident hs
    )
    return pl.pallas_call(
        functools.partial(_recurrent_head_kernel, num_classes=num_classes),
        grid_spec=grid_spec,
        out_shape=jax.ShapeDtypeStruct((T, B * L, PAD), jnp.float32),
        compiler_params=pltpu.CompilerParams(
            dimension_semantics=("arbitrary", "arbitrary")),
    )(sensor_ids, x_feat, wh, wx, emb, init, wo, bo)


# ----------------------------------------------------------------------------
# Parameter padding (zero-pad to lane-dense 128-wide kernel operands)
# ----------------------------------------------------------------------------
def _pad2(a, rows, cols, dtype):
    out = jnp.zeros((rows, cols), dtype)
    return out.at[: a.shape[0], : a.shape[1]].set(a.astype(dtype))


def _pad_kernel_params(p):
    c, feat = p["bb_w"].shape
    d = p["rec_wh"].shape[0]
    v = p["sensor_emb"].shape[0]
    l = p["init_latents"].shape[0]
    nc = p["head_wc"].shape[1]
    assert feat <= PAD and d <= PAD and nc + 2 <= PAD
    head_w = jnp.concatenate([p["head_wc"], p["head_wp"]], axis=1)   # (D, NC+2)
    head_b = jnp.concatenate([p["head_bc"], p["head_bp"]], axis=1)   # (1, NC+2)
    return {
        "bb_w": _pad2(p["bb_w"], c, PAD, jnp.bfloat16),
        "bb_b": _pad2(p["bb_b"], 1, PAD, jnp.float32),
        "rec_wh": _pad2(p["rec_wh"], PAD, PAD, jnp.bfloat16),
        "rec_wx": _pad2(p["rec_wx"], PAD, PAD, jnp.bfloat16),
        "sensor_emb": _pad2(p["sensor_emb"], v, PAD, jnp.float32).reshape(v, 1, PAD),
        "init_latents": _pad2(p["init_latents"], l, PAD, jnp.float32),
        "head_w": _pad2(head_w, PAD, PAD, jnp.bfloat16),
        "head_b": _pad2(head_b, 1, PAD, jnp.float32),
    }


# ----------------------------------------------------------------------------
# AutoRegressiveModule forward (host glue mirrors the PyTorch orchestration)
# ----------------------------------------------------------------------------
def auto_regressive_forward(params, samples, targets, shuffle_views=False):
    """samples: (B, T, V, C, H, W) f32.  targets: [per-timestamp list of dicts
    with 'active_views'].  Returns (result dict, inner targets list)."""
    assert len(targets) == 1
    targets = targets[0]

    B, T, V, C, H, W = samples.shape
    assert len(targets) == T and V >= 1 and T >= 1

    L, D = params["init_latents"].shape
    NC = params["head_wc"].shape[1]
    kp = _pad_kernel_params(params)

    # src = samples.permute(1,2,0,3,4,5) -> (T,V,B,C,H,W); backbone works in
    # NHWC rows (absorbs the post-backbone .permute(0,2,3,1) of the PyTorch code)
    src = jnp.transpose(samples, (1, 2, 0, 4, 5, 3))            # (T,V,B,H,W,C)
    n_img = T * V * B
    hw = H * W
    x2d = src.reshape(n_img * hw, C).astype(jnp.bfloat16)

    # one batched backbone call over every (t, v, b) image; pool fused in-kernel
    pooled = backbone_pool_apply(x2d, kp["bb_w"], kp["bb_b"],
                                 n_img=n_img, hw=hw)            # (n_img, PAD)
    pooled = pooled.reshape(T, V, B, PAD)

    # inactive view => recurrent module gets zero features (data=None path)
    active = np.stack([np.asarray(targets[t]["active_views"]).astype(np.float32)
                       for t in range(T)])                      # (T, V)
    pooled = pooled * jnp.asarray(active)[:, :, None, None]

    # sensor permutation (identity, like torch.arange)
    perms = np.tile(np.arange(V, dtype=np.int32), (T, 1))
    if shuffle_views:
        # TODO(synk): torch.randperm-based view shuffling not reproduced
        # (deterministic identity permutation used instead).
        pass
    sensor_ids = jnp.asarray(perms.reshape(T * V), jnp.int32)

    # single kernel: recurrent chain over all (T, V) steps + per-timestamp head
    fused = recurrent_head_apply(
        pooled, sensor_ids, kp["rec_wh"], kp["rec_wx"], kp["sensor_emb"],
        kp["init_latents"], kp["head_w"], kp["head_b"],
        num_classes=NC)                                         # (T, B*L, PAD)

    fused = fused.reshape(T, B, L, PAD)
    result = {
        "pred_logits": fused[..., :NC].reshape(T * B, L, NC),
        "pred_center_points": fused[..., NC:NC + 2].reshape(T * B, L, 2),
    }
    return result, targets


# ----------------------------------------------------------------------------
# Deterministic parameter construction (synthetic backbone / recurrent / head)
# ----------------------------------------------------------------------------
def make_params(cin, feat_dim, latent_len, latent_dim, num_views, num_classes, key):
    ks = jax.random.split(key, 9)
    s = 0.1
    return {
        "bb_w": s * jax.random.normal(ks[0], (cin, feat_dim), jnp.float32),
        "bb_b": s * jax.random.normal(ks[1], (1, feat_dim), jnp.float32),
        "rec_wh": s * jax.random.normal(ks[2], (latent_dim, latent_dim), jnp.float32),
        "rec_wx": s * jax.random.normal(ks[3], (feat_dim, latent_dim), jnp.float32),
        "sensor_emb": s * jax.random.normal(ks[4], (num_views, latent_dim), jnp.float32),
        "init_latents": s * jax.random.normal(ks[5], (latent_len, latent_dim), jnp.float32),
        "head_wc": s * jax.random.normal(ks[6], (latent_dim, num_classes), jnp.float32),
        "head_bc": jnp.zeros((1, num_classes), jnp.float32),
        "head_wp": s * jax.random.normal(ks[7], (latent_dim, 2), jnp.float32),
        "head_bp": jnp.zeros((1, 2), jnp.float32),
    }


if __name__ == "__main__":
    # Small shapes implied by the forward: samples (B, T, V, C, H, W)
    B, T, V, C, H, W = 2, 2, 3, 4, 16, 16
    FEAT, L, D, NC = 32, 8, 32, 5

    key = jax.random.PRNGKey(0)
    k_in, k_par = jax.random.split(key)
    samples = jax.random.normal(k_in, (B, T, V, C, H, W), jnp.float32)
    params = make_params(C, FEAT, L, D, V, NC, k_par)

    targets = [
        [
            {"active_views": np.array([True, False, True])},
            {"active_views": np.array([True, True, True])},
        ]
    ]

    result, tgt = auto_regressive_forward(params, samples, targets, shuffle_views=False)
    jax.block_until_ready(result["pred_logits"])
    jax.block_until_ready(result["pred_center_points"])

    assert result["pred_logits"].shape == (T * B, L, NC)
    assert result["pred_center_points"].shape == (T * B, L, 2)
    print("KERNEL_OK")
</pallas_src>

<mosaic_0001>
module attributes {stable_mosaic.version = 11 : i64} {
  func.func @_backbone_pool_kernel(%arg0: i32, %arg1: memref<1536x4xbf16, #tpu.memory_space<vmem>>, %arg2: memref<4x128xbf16, #tpu.memory_space<vmem>>, %arg3: memref<1x128xf32, #tpu.memory_space<vmem>>, %arg4: memref<1x6x128xf32, #tpu.memory_space<vmem>>) attributes {dimension_semantics = [#tpu.dimension_semantics<parallel>], iteration_bounds = array<i64: 2>, scalar_prefetch = 0 : i64, scratch_operands = 0 : i64, tpu.core_type = #tpu.core_type<tc>, window_params = [{transform_indices = @transform_0, window_bounds = array<i64: 1536, 4>}, {pipeline_mode = #tpu.pipeline_mode<synchronous>, transform_indices = @transform_1, window_bounds = array<i64: 4, 128>}, {pipeline_mode = #tpu.pipeline_mode<synchronous>, transform_indices = @transform_2, window_bounds = array<i64: 1, 128>}, {transform_indices = @transform_3, window_bounds = array<i64: 1, 6, 128>}]} {
    %c0 = arith.constant 0 : index
    %c0_0 = arith.constant 0 : index
    %0 = vector.load %arg1[%c0, %c0_0] : memref<1536x4xbf16, #tpu.memory_space<vmem>>, vector<1536x4xbf16>
    %c0_1 = arith.constant 0 : index
    %c0_2 = arith.constant 0 : index
    %1 = vector.load %arg2[%c0_1, %c0_2] : memref<4x128xbf16, #tpu.memory_space<vmem>>, vector<4x128xbf16>
    %cst = arith.constant dense<0.000000e+00> : vector<1536x128xf32>
    %2 = tpu.matmul %0, %1, %cst {dimension_numbers = #tpu.dot_dimension_numbers<[1], [0], [0], [1], [0, 0, 1, 1], [], []>} : vector<1536x4xbf16>, vector<4x128xbf16>, vector<1536x128xf32> -> vector<1536x128xf32>
    %c0_3 = arith.constant 0 : index
    %c0_4 = arith.constant 0 : index
    %3 = vector.load %arg3[%c0_3, %c0_4] : memref<1x128xf32, #tpu.memory_space<vmem>>, vector<1x128xf32>
    %4 = vector.broadcast %3 : vector<1x128xf32> to vector<1536x128xf32>
    %5 = arith.addf %2, %4 : vector<1536x128xf32>
    %cst_5 = arith.constant 0.000000e+00 : f32
    %6 = vector.broadcast %cst_5 : f32 to vector<1536x128xf32>
    %7 = arith.maximumf %5, %6 : vector<1536x128xf32>
    %8 = vector.shape_cast %7 : vector<1536x128xf32> to vector<6x256x128xf32>
    %cst_6 = arith.constant dense<0.000000e+00> : vector<6x128xf32>
    %9 = vector.multi_reduction <add>, %8, %cst_6 [1] : vector<6x256x128xf32> to vector<6x128xf32>
    %cst_7 = arith.constant 2.560000e+02 : f32
    %10 = vector.broadcast %cst_7 : f32 to vector<6x128xf32>
    %11 = arith.divf %9, %10 : vector<6x128xf32>
    %c0_8 = arith.constant 0 : index
    %c0_9 = arith.constant 0 : index
    %c0_10 = arith.constant 0 : index
    %12 = vector.load %arg4[%c0_8, %c0_9, %c0_10] : memref<1x6x128xf32, #tpu.memory_space<vmem>>, vector<1x6x128xf32>
    %13 = vector.shape_cast %12 : vector<1x6x128xf32> to vector<6x128xf32>
    %14 = vector.shape_cast %11 : vector<6x128xf32> to vector<1x6x128xf32>
    tpu.vector_store %arg4[%c0_8, %c0_9, %c0_10], %14 {strides = array<i32>} : memref<1x6x128xf32, #tpu.memory_space<vmem>>, vector<1x6x128xf32>,
    return
  }
  func.func @transform_0(%arg0: i32) -> (i32, i32) {
    %c0_i32 = arith.constant 0 : i32
    %c0_i32_0 = arith.constant 0 : i32
    return %arg0, %c0_i32 : i32, i32
  }
  func.func @transform_1(%arg0: i32) -> (i32, i32) {
    %c0_i32 = arith.constant 0 : i32
    %c0_i32_0 = arith.constant 0 : i32
    %c0_i32_1 = arith.constant 0 : i32
    return %c0_i32, %c0_i32_0 : i32, i32
  }
  func.func @transform_2(%arg0: i32) -> (i32, i32) {
    %c0_i32 = arith.constant 0 : i32
    %c0_i32_0 = arith.constant 0 : i32
    %c0_i32_1 = arith.constant 0 : i32
    return %c0_i32, %c0_i32_0 : i32, i32
  }
  func.func @transform_3(%arg0: i32) -> (i32, i32, i32) {
    %c0_i32 = arith.constant 0 : i32
    %c0_i32_0 = arith.constant 0 : i32
    %c0_i32_1 = arith.constant 0 : i32
    return %arg0, %c0_i32, %c0_i32_0 : i32, i32, i32
  }
}

</mosaic_0001>

<llo_original>
// kernel: tpu_custom_call.1
$region0: #{tpu_custom_call.1}
  #allocation0 [shape = 'u32[]', space=smem, size = 0x4, offset = 0x4, fixed_abs, tag = 'smem constant byte address 0x4 - core index']
  #allocation1 [shape = 'u32[72,128]{1,0:T(1,128)}', space=vmem, size = 0x9000, scoped, tag = 'internal scratch']
  %s0 = inlined_call_operand.vmem [shape: bf16[3072,4], index: 0, kind: input, shape index: {}]
  %s1 = inlined_call_operand.vmem [shape: bf16[4,128], index: 1, kind: input, shape index: {}]
  %s2 = inlined_call_operand.vmem [shape: f32[1,128], index: 2, kind: input, shape index: {}]
  %s3 = inlined_call_operand.vmem [shape: f32[2,6,128], index: 3, kind: output, shape index: {}]
  %s4 = sld [smem:[#allocation0]]
  $region45: #{tpu_custom_call.1} parent=0
    _
  %s6 = ssub.s32 1, %s4
  %s7 = scalar_select 0, %s6, %s4
  loop: start=0, step=1, limit=4
  $region2: #{tpu_custom_call.1} parent=0 // loop_pre_header
    _
  $region3: #{tpu_custom_call.1} parent=0 // loop_header
    %s9 = sphi 0, %s13
    %p10 = scmp.ge.s32.totalorder %s9, 4
    %s19 = sphi 0, %s21
    %s22 = sphi 0, %s19
    %s23 = sphi 0, %s22
    %s39 = sphi 0, %s23
    %s43 = sphi 0, %s43
    %s45 = sphi 0, %s43
    %s46 = sphi 0, %s45
    %s60 = sphi 0, %s46
    %s64 = sphi 0, %s64
    %s66 = sphi 0, %s64
    %s67 = sphi 0, %s66
    %s81 = sphi 0, %s67
    %s87 = sphi 0, %s89
    %s90 = sphi 0, %s87
    %s91 = sphi 0, %s90
    %s107 = sphi 0, %s91
  $region4: #{tpu_custom_call.1} parent=0 // loop_header_branch
    %12 = sbr.rel (%p10) target = $region8
  $region5: #{tpu_custom_call.1} parent=0 // loop_body
    %s14 = ssub.s32 %s9, 1
    %s15 = ssub.s32 %s9, 2
    %s16 = sadd.s32 %s9, 1
    %s17 = ssub.s32 %s9, %s16
    %p18 = scmp.eq.s32.totalorder %s17, 0
    %s20 = sadd.s32 %s19, 1
    %s21 = scalar_select %p18, %s19, %s20
    %p24 = pneg %p18
    %p25 = scmp.eq.s32.totalorder %s9, 1
    %p26 = por %p24, %p25
    %p27 = scmp.ne.s32.totalorder %s19, %s22
    %p28 = scmp.eq.s32.totalorder %s9, 0
    %p29 = por %p27, %p28
    %p30 = scmp.ne.s32.totalorder %s19, %s22
    %p31 = scmp.eq.s32.totalorder %s14, 1
    %p32 = por %p30, %p31
    %p33 = scmp.ne.s32.totalorder %s22, %s23
    %p34 = scmp.eq.s32.totalorder %s14, 0
    %p35 = por %p33, %p34
    %p36 = scmp.ne.s32.totalorder %s22, %s23
    %p37 = scmp.eq.s32.totalorder %s15, 1
    %p38 = por %p36, %p37
    %p40 = scmp.ne.s32.totalorder %s23, %s39
    %p41 = scmp.eq.s32.totalorder %s15, 0
    %p42 = por %p40, %p41
    %s44 = sadd.s32 %s43, 1
    %p47 = scmp.eq.s32.totalorder %s9, 1
    %p48 = scmp.ne.s32.totalorder %s43, %s45
    %p49 = scmp.eq.s32.totalorder %s9, 0
    %p50 = por %p48, %p49
    %p51 = scmp.ne.s32.totalorder %s43, %s45
    %p52 = scmp.eq.s32.totalorder %s14, 1
    %p53 = por %p51, %p52
    %p54 = scmp.ne.s32.totalorder %s45, %s46
    %p55 = scmp.eq.s32.totalorder %s14, 0
    %p56 = por %p54, %p55
    %p57 = scmp.ne.s32.totalorder %s45, %s46
    %p58 = scmp.eq.s32.totalorder %s15, 1
    %p59 = por %p57, %p58
    %p61 = scmp.ne.s32.totalorder %s46, %s60
    %p62 = scmp.eq.s32.totalorder %s15, 0
    %p63 = por %p61, %p62
    %s65 = sadd.s32 %s64, 1
    %p68 = scmp.eq.s32.totalorder %s9, 1
    %p69 = scmp.ne.s32.totalorder %s64, %s66
    %p70 = scmp.eq.s32.totalorder %s9, 0
    %p71 = por %p69, %p70
    %p72 = scmp.ne.s32.totalorder %s64, %s66
    %p73 = scmp.eq.s32.totalorder %s14, 1
    %p74 = por %p72, %p73
    %p75 = scmp.ne.s32.totalorder %s66, %s67
    %p76 = scmp.eq.s32.totalorder %s14, 0
    %p77 = por %p75, %p76
    %p78 = scmp.ne.s32.totalorder %s66, %s67
    %p79 = scmp.eq.s32.totalorder %s15, 1
    %p80 = por %p78, %p79
    %p82 = scmp.ne.s32.totalorder %s67, %s81
    %p83 = scmp.eq.s32.totalorder %s15, 0
    %p84 = por %p82, %p83
    %s85 = ssub.s32 %s9, %s16
    %p86 = scmp.eq.s32.totalorder %s85, 0
    %s88 = sadd.s32 %s87, 1
    %s89 = scalar_select %p86, %s87, %s88
    %p92 = pneg %p86
    %p93 = scmp.eq.s32.totalorder %s9, 1
    %p94 = por %p92, %p93
    %p95 = scmp.ne.s32.totalorder %s87, %s90
    %p96 = scmp.eq.s32.totalorder %s9, 0
    %p97 = por %p95, %p96
    %p98 = scmp.ne.s32.totalorder %s87, %s90
    %p99 = scmp.eq.s32.totalorder %s14, 1
    %p100 = por %p98, %p99
    %p101 = scmp.ne.s32.totalorder %s90, %s91
    %p102 = scmp.eq.s32.totalorder %s14, 0
    %p103 = por %p101, %p102
    %p104 = scmp.ne.s32.totalorder %s90, %s91
    %p105 = scmp.eq.s32.totalorder %s15, 1
    %p106 = por %p104, %p105
    %p108 = scmp.ne.s32.totalorder %s91, %s107
    %p109 = scmp.eq.s32.totalorder %s15, 0
    %p110 = por %p108, %p109
    %p111 = scmp.le.s32.totalorder 1, %s9
    %p112 = scmp.lt.s32.totalorder %s9, 3
    %p113 = pnand %p111, %p112
    %p114 = pneg %p113
    // Predicated region
    $region9: #{tpu_custom_call.1} parent=5 // pred_check
      _
    $region10: #{tpu_custom_call.1} parent=5 // pred_check_branch
      %116 = sbr.rel (%p113) target = $region12
    $region11: #{tpu_custom_call.1} parent=5 // pred_region
      %s117 = ssub.s32 %s9, 1
      // Predicated region
      $region13: #{tpu_custom_call.1} parent=11 // pred_check
        %p118 = pneg %p56
      $region14: #{tpu_custom_call.1} parent=11 // pred_check_branch
        %120 = sbr.rel (%p118) target = $region16
      $region15: #{tpu_custom_call.1} parent=11 // pred_region
        _
      $region16: #{tpu_custom_call.1} parent=11 // pred_fallthru
        _
      // Predicated region
      $region17: #{tpu_custom_call.1} parent=11 // pred_check
        %p121 = pneg %p77
      $region18: #{tpu_custom_call.1} parent=11 // pred_check_branch
        %123 = sbr.rel (%p121) target = $region20
      $region19: #{tpu_custom_call.1} parent=11 // pred_region
        _
      $region20: #{tpu_custom_call.1} parent=11 // pred_fallthru
        _
    $region12: #{tpu_custom_call.1} parent=5 // pred_fallthru
      _
    %p124 = scmp.lt.s32.totalorder %s9, 2
    // Predicated region
    $region21: #{tpu_custom_call.1} parent=5 // pred_check
      %p125 = pneg %p124
    $region22: #{tpu_custom_call.1} parent=5 // pred_check_branch
      %127 = sbr.rel (%p125) target = $region24
    $region23: #{tpu_custom_call.1} parent=5 // pred_region
      // Predicated region
      $region25: #{tpu_custom_call.1} parent=23 // pred_check
        %p128 = pneg %p29
      $region26: #{tpu_custom_call.1} parent=23 // pred_check_branch
        %130 = sbr.rel (%p128) target = $region28
      $region27: #{tpu_custom_call.1} parent=23 // pred_region
        %s131 = smul.u32 192, %s9
        %p132 = scmp.lt.s32.totalorder %s131, 383
        %s133 = scalar_select %p132, %s131, 383
        %s134 = smul.addr %s133, 4
        %s135 = scalar_lea.vmem %s0, %s134
        %s136 = smul.u32 192, %s9
      $region28: #{tpu_custom_call.1} parent=23 // pred_fallthru
        _
    $region24: #{tpu_custom_call.1} parent=5 // pred_fallthru
      _
    %p137 = scmp.le.s32.totalorder 1, %s9
    %p138 = scmp.lt.s32.totalorder %s9, 3
    %p139 = pnand %p137, %p138
    %p140 = pneg %p139
    // Predicated region
    $region29: #{tpu_custom_call.1} parent=5 // pred_check
      _
    $region30: #{tpu_custom_call.1} parent=5 // pred_check_branch
      %142 = sbr.rel (%p139) target = $region32
    $region31: #{tpu_custom_call.1} parent=5 // pred_region
      %s143 = ssub.s32 %s9, 1
      %s144 = smul.u32 192, %s14
      %p145 = scmp.lt.s32.totalorder %s144, 383
      %s146 = scalar_select %p145, %s144, 383
      %s147 = smul.addr %s146, 4
      %s148 = scalar_lea.vmem %s0, %s147
      %p149 = pneg %p35
      %p150 = pneg %p32
      %p151 = pneg %p56
      %p152 = pneg %p53
      %p153 = pneg %p77
      %p154 = pneg %p74
      %p155 = pneg %p103
      %p156 = pneg %p100
      %p157 = scmp.lt.s32.totalorder %s14, 1
      %s158 = scalar_select %p157, %s14, 1
      %s159 = smul.addr %s158, 8
      %s160 = scalar_lea.vmem %s3, %s159
      %s161 = smul.u32 192, %s14
      %p162 = scmp.lt.s32.totalorder %s161, 383
      %s163 = scalar_select %p162, %s161, 383
      %s164 = smul.addr %s163, 4
      %s165 = scalar_lea.vmem %s0, %s164
      %s166 = smul.u32 192, %s14
      %p167 = scmp.lt.s32.totalorder %s14, 1
      %s168 = scalar_select %p167, %s14, 1
      %s169 = smul.addr %s168, 8
      %s170 = scalar_lea.vmem %s3, %s169
      %v172 = vld [vmem:[%s165] sm:$0xf]
      %v173 = vld [vmem:[%s165 + $0x4] sm:$0xf]
      %v174 = vld [vmem:[%s165 + $0x8] sm:$0xf]
      %v175 = vld [vmem:[%s165 + $0xc] sm:$0xf]
      %v176 = vld [vmem:[%s165 + $0x10] sm:$0xf]
      %v177 = vld [vmem:[%s165 + $0x14] sm:$0xf]
      %v178 = vld [vmem:[%s165 + $0x18] sm:$0xf]
      %v179 = vld [vmem:[%s165 + $0x1c] sm:$0xf]
      %v180 = vld [vmem:[%s165 + $0x20] sm:$0xf]
      %v181 = vld [vmem:[%s165 + $0x24] sm:$0xf]
      %v182 = vld [vmem:[%s165 + $0x28] sm:$0xf]
      %v183 = vld [vmem:[%s165 + $0x2c] sm:$0xf]
      %v184 = vld [vmem:[%s165 + $0x30] sm:$0xf]
      %v185 = vld [vmem:[%s165 + $0x34] sm:$0xf]
      %v186 = vld [vmem:[%s165 + $0x38] sm:$0xf]
      %v187 = vld [vmem:[%s165 + $0x3c] sm:$0xf]
      %v188 = vld [vmem:[%s165 + $0x40] sm:$0xf]
      %v189 = vld [vmem:[%s165 + $0x44] sm:$0xf]
      %v190 = vld [vmem:[%s165 + $0x48] sm:$0xf]
      %v191 = vld [vmem:[%s165 + $0x4c] sm:$0xf]
      %v192 = vld [vmem:[%s165 + $0x50] sm:$0xf]
      %v193 = vld [vmem:[%s165 + $0x54] sm:$0xf]
      %v194 = vld [vmem:[%s165 + $0x58] sm:$0xf]
      %v195 = vld [vmem:[%s165 + $0x5c] sm:$0xf]
      %v196 = vld [vmem:[%s165 + $0x60] sm:$0xf]
      %v197 = vld [vmem:[%s165 + $0x64] sm:$0xf]
      %v198 = vld [vmem:[%s165 + $0x68] sm:$0xf]
      %v199 = vld [vmem:[%s165 + $0x6c] sm:$0xf]
      %v200 = vld [vmem:[%s165 + $0x70] sm:$0xf]
      %v201 = vld [vmem:[%s165 + $0x74] sm:$0xf]
      %v202 = vld [vmem:[%s165 + $0x78] sm:$0xf]
      %v203 = vld [vmem:[%s165 + $0x7c] sm:$0xf]
      %v204 = vld [vmem:[%s165 + $0x80] sm:$0xf]
      %v205 = vld [vmem:[%s165 + $0x84] sm:$0xf]
      %v206 = vld [vmem:[%s165 + $0x88] sm:$0xf]
      %v207 = vld [vmem:[%s165 + $0x8c] sm:$0xf]
      %v208 = vld [vmem:[%s165 + $0x90] sm:$0xf]
      %v209 = vld [vmem:[%s165 + $0x94] sm:$0xf]
      %v210 = vld [vmem:[%s165 + $0x98] sm:$0xf]
      %v211 = vld [vmem:[%s165 + $0x9c] sm:$0xf]
      %v212 = vld [vmem:[%s165 + $0xa0] sm:$0xf]
      %v213 = vld [vmem:[%s165 + $0xa4] sm:$0xf]
      %v214 = vld [vmem:[%s165 + $0xa8] sm:$0xf]
      %v215 = vld [vmem:[%s165 + $0xac] sm:$0xf]
      %v216 = vld [vmem:[%s165 + $0xb0] sm:$0xf]
      %v217 = vld [vmem:[%s165 + $0xb4] sm:$0xf]
      %v218 = vld [vmem:[%s165 + $0xb8] sm:$0xf]
      %v219 = vld [vmem:[%s165 + $0xbc] sm:$0xf]
      %v220 = vld [vmem:[%s165 + $0xc0] sm:$0xf]
      %v221 = vld [vmem:[%s165 + $0xc4] sm:$0xf]
      %v222 = vld [vmem:[%s165 + $0xc8] sm:$0xf]
      %v223 = vld [vmem:[%s165 + $0xcc] sm:$0xf]
      %v224 = vld [vmem:[%s165 + $0xd0] sm:$0xf]
      %v225 = vld [vmem:[%s165 + $0xd4] sm:$0xf]
      %v226 = vld [vmem:[%s165 + $0xd8] sm:$0xf]
      %v227 = vld [vmem:[%s165 + $0xdc] sm:$0xf]
      %v228 = vld [vmem:[%s165 + $0xe0] sm:$0xf]
      %v229 = vld [vmem:[%s165 + $0xe4] sm:$0xf]
      %v230 = vld [vmem:[%s165 + $0xe8] sm:$0xf]
      %v231 = vld [vmem:[%s165 + $0xec] sm:$0xf]
      %v232 = vld [vmem:[%s165 + $0xf0] sm:$0xf]
      %v233 = vld [vmem:[%s165 + $0xf4] sm:$0xf]
      %v234 = vld [vmem:[%s165 + $0xf8] sm:$0xf]
      %v235 = vld [vmem:[%s165 + $0xfc] sm:$0xf]
      %v236 = vld [vmem:[%s165 + $0x100] sm:$0xf]
      %v237 = vld [vmem:[%s165 + $0x104] sm:$0xf]
      %v238 = vld [vmem:[%s165 + $0x108] sm:$0xf]
      %v239 = vld [vmem:[%s165 + $0x10c] sm:$0xf]
      %v240 = vld [vmem:[%s165 + $0x110] sm:$0xf]
      %v241 = vld [vmem:[%s165 + $0x114] sm:$0xf]
      %v242 = vld [vmem:[%s165 + $0x118] sm:$0xf]
      %v243 = vld [vmem:[%s165 + $0x11c] sm:$0xf]
      %v244 = vld [vmem:[%s165 + $0x120] sm:$0xf]
      %v245 = vld [vmem:[%s165 + $0x124] sm:$0xf]
      %v246 = vld [vmem:[%s165 + $0x128] sm:$0xf]
      %v247 = vld [vmem:[%s165 + $0x12c] sm:$0xf]
      %v248 = vld [vmem:[%s165 + $0x130] sm:$0xf]
      %v249 = vld [vmem:[%s165 + $0x134] sm:$0xf]
      %v250 = vld [vmem:[%s165 + $0x138] sm:$0xf]
      %v251 = vld [vmem:[%s165 + $0x13c] sm:$0xf]
      %v252 = vld [vmem:[%s165 + $0x140] sm:$0xf]
      %v253 = vld [vmem:[%s165 + $0x144] sm:$0xf]
      %v254 = vld [vmem:[%s165 + $0x148] sm:$0xf]
      %v255 = vld [vmem:[%s165 + $0x14c] sm:$0xf]
      %v256 = vld [vmem:[%s165 + $0x150] sm:$0xf]
      %v257 = vld [vmem:[%s165 + $0x154] sm:$0xf]
      %v258 = vld [vmem:[%s165 + $0x158] sm:$0xf]
      %v259 = vld [vmem:[%s165 + $0x15c] sm:$0xf]
      %v260 = vld [vmem:[%s165 + $0x160] sm:$0xf]
      %v261 = vld [vmem:[%s165 + $0x164] sm:$0xf]
      %v262 = vld [vmem:[%s165 + $0x168] sm:$0xf]
      %v263 = vld [vmem:[%s165 + $0x16c] sm:$0xf]
      %v264 = vld [vmem:[%s165 + $0x170] sm:$0xf]
      %v265 = vld [vmem:[%s165 + $0x174] sm:$0xf]
      %v266 = vld [vmem:[%s165 + $0x178] sm:$0xf]
      %v267 = vld [vmem:[%s165 + $0x17c] sm:$0xf]
      %v268 = vld [vmem:[%s165 + $0x180] sm:$0xf]
      %v269 = vld [vmem:[%s165 + $0x184] sm:$0xf]
      %v270 = vld [vmem:[%s165 + $0x188] sm:$0xf]
      %v271 = vld [vmem:[%s165 + $0x18c] sm:$0xf]
      %v272 = vld [vmem:[%s165 + $0x190] sm:$0xf]
      %v273 = vld [vmem:[%s165 + $0x194] sm:$0xf]
      %v274 = vld [vmem:[%s165 + $0x198] sm:$0xf]
      %v275 = vld [vmem:[%s165 + $0x19c] sm:$0xf]
      %v276 = vld [vmem:[%s165 + $0x1a0] sm:$0xf]
      %v277 = vld [vmem:[%s165 + $0x1a4] sm:$0xf]
      %v278 = vld [vmem:[%s165 + $0x1a8] sm:$0xf]
      %v279 = vld [vmem:[%s165 + $0x1ac] sm:$0xf]
      %v280 = vld [vmem:[%s165 + $0x1b0] sm:$0xf]
      %v281 = vld [vmem:[%s165 + $0x1b4] sm:$0xf]
      %v282 = vld [vmem:[%s165 + $0x1b8] sm:$0xf]
      %v283 = vld [vmem:[%s165 + $0x1bc] sm:$0xf]
      %v284 = vld [vmem:[%s165 + $0x1c0] sm:$0xf]
      %v285 = vld [vmem:[%s165 + $0x1c4] sm:$0xf]
      %v286 = vld [vmem:[%s165 + $0x1c8] sm:$0xf]
      %v287 = vld [vmem:[%s165 + $0x1cc] sm:$0xf]
      %v288 = vld [vmem:[%s165 + $0x1d0] sm:$0xf]
      %v289 = vld [vmem:[%s165 + $0x1d4] sm:$0xf]
      %v290 = vld [vmem:[%s165 + $0x1d8] sm:$0xf]
      %v291 = vld [vmem:[%s165 + $0x1dc] sm:$0xf]
      %v292 = vld [vmem:[%s165 + $0x1e0] sm:$0xf]
      %v293 = vld [vmem:[%s165 + $0x1e4] sm:$0xf]
      %v294 = vld [vmem:[%s165 + $0x1e8] sm:$0xf]
      %v295 = vld [vmem:[%s165 + $0x1ec] sm:$0xf]
      %v296 = vld [vmem:[%s165 + $0x1f0] sm:$0xf]
      %v297 = vld [vmem:[%s165 + $0x1f4] sm:$0xf]
      %v298 = vld [vmem:[%s165 + $0x1f8] sm:$0xf]
      %v299 = vld [vmem:[%s165 + $0x1fc] sm:$0xf]
      %v300 = vld [vmem:[%s165 + $0x200] sm:$0xf]
      %v301 = vld [vmem:[%s165 + $0x204] sm:$0xf]
      %v302 = vld [vmem:[%s165 + $0x208] sm:$0xf]
      %v303 = vld [vmem:[%s165 + $0x20c] sm:$0xf]
      %v304 = vld [vmem:[%s165 + $0x210] sm:$0xf]
      %v305 = vld [vmem:[%s165 + $0x214] sm:$0xf]
      %v306 = vld [vmem:[%s165 + $0x218] sm:$0xf]
      %v307 = vld [vmem:[%s165 + $0x21c] sm:$0xf]
      %v308 = vld [vmem:[%s165 + $0x220] sm:$0xf]
      %v309 = vld [vmem:[%s165 + $0x224] sm:$0xf]
      %v310 = vld [vmem:[%s165 + $0x228] sm:$0xf]
      %v311 = vld [vmem:[%s165 + $0x22c] sm:$0xf]
      %v312 = vld [vmem:[%s165 + $0x230] sm:$0xf]
      %v313 = vld [vmem:[%s165 + $0x234] sm:$0xf]
      %v314 = vld [vmem:[%s165 + $0x238] sm:$0xf]
      %v315 = vld [vmem:[%s165 + $0x23c] sm:$0xf]
      %v316 = vld [vmem:[%s165 + $0x240] sm:$0xf]
      %v317 = vld [vmem:[%s165 + $0x244] sm:$0xf]
      %v318 = vld [vmem:[%s165 + $0x248] sm:$0xf]
      %v319 = vld [vmem:[%s165 + $0x24c] sm:$0xf]
      %v320 = vld [vmem:[%s165 + $0x250] sm:$0xf]
      %v321 = vld [vmem:[%s165 + $0x254] sm:$0xf]
      %v322 = vld [vmem:[%s165 + $0x258] sm:$0xf]
      %v323 = vld [vmem:[%s165 + $0x25c] sm:$0xf]
      %v324 = vld [vmem:[%s165 + $0x260] sm:$0xf]
      %v325 = vld [vmem:[%s165 + $0x264] sm:$0xf]
      %v326 = vld [vmem:[%s165 + $0x268] sm:$0xf]
      %v327 = vld [vmem:[%s165 + $0x26c] sm:$0xf]
      %v328 = vld [vmem:[%s165 + $0x270] sm:$0xf]
      %v329 = vld [vmem:[%s165 + $0x274] sm:$0xf]
      %v330 = vld [vmem:[%s165 + $0x278] sm:$0xf]
      %v331 = vld [vmem:[%s165 + $0x27c] sm:$0xf]
      %v332 = vld [vmem:[%s165 + $0x280] sm:$0xf]
      %v333 = vld [vmem:[%s165 + $0x284] sm:$0xf]
      %v334 = vld [vmem:[%s165 + $0x288] sm:$0xf]
      %v335 = vld [vmem:[%s165 + $0x28c] sm:$0xf]
      %v336 = vld [vmem:[%s165 + $0x290] sm:$0xf]
      %v337 = vld [vmem:[%s165 + $0x294] sm:$0xf]
      %v338 = vld [vmem:[%s165 + $0x298] sm:$0xf]
      %v339 = vld [vmem:[%s165 + $0x29c] sm:$0xf]
      %v340 = vld [vmem:[%s165 + $0x2a0] sm:$0xf]
      %v341 = vld [vmem:[%s165 + $0x2a4] sm:$0xf]
      %v342 = vld [vmem:[%s165 + $0x2a8] sm:$0xf]
      %v343 = vld [vmem:[%s165 + $0x2ac] sm:$0xf]
      %v344 = vld [vmem:[%s165 + $0x2b0] sm:$0xf]
      %v345 = vld [vmem:[%s165 + $0x2b4] sm:$0xf]
      %v346 = vld [vmem:[%s165 + $0x2b8] sm:$0xf]
      %v347 = vld [vmem:[%s165 + $0x2bc] sm:$0xf]
      %v348 = vld [vmem:[%s165 + $0x2c0] sm:$0xf]
      %v349 = vld [vmem:[%s165 + $0x2c4] sm:$0xf]
      %v350 = vld [vmem:[%s165 + $0x2c8] sm:$0xf]
      %v351 = vld [vmem:[%s165 + $0x2cc] sm:$0xf]
      %v352 = vld [vmem:[%s165 + $0x2d0] sm:$0xf]
      %v353 = vld [vmem:[%s165 + $0x2d4] sm:$0xf]
      %v354 = vld [vmem:[%s165 + $0x2d8] sm:$0xf]
      %v355 = vld [vmem:[%s165 + $0x2dc] sm:$0xf]
      %v356 = vld [vmem:[%s165 + $0x2e0] sm:$0xf]
      %v357 = vld [vmem:[%s165 + $0x2e4] sm:$0xf]
      %v358 = vld [vmem:[%s165 + $0x2e8] sm:$0xf]
      %v359 = vld [vmem:[%s165 + $0x2ec] sm:$0xf]
      %v360 = vld [vmem:[%s165 + $0x2f0] sm:$0xf]
      %v361 = vld [vmem:[%s165 + $0x2f4] sm:$0xf]
      %v362 = vld [vmem:[%s165 + $0x2f8] sm:$0xf]
      %v363 = vld [vmem:[%s165 + $0x2fc] sm:$0xf]
      %v364 = vld [vmem:[%s1] sm:$0x3]
      %v365 = vld [vmem:[%s2] sm:$0x1]
      %v367 = vperm.slane %v365, 0
      %v561 = vunpack.c.l.b16 %v172
      %v562 = vunpack.c.l.b16 %v173
      %v563 = vunpack.c.l.b16 %v174
      %v564 = vunpack.c.l.b16 %v175
      %v565 = vunpack.c.l.b16 %v176
      %v566 = vunpack.c.l.b16 %v177
      %v567 = vunpack.c.l.b16 %v178
      %v568 = vunpack.c.l.b16 %v179
      %v569 = vunpack.c.l.b16 %v180
      %v570 = vunpack.c.l.b16 %v181
      %v571 = vunpack.c.l.b16 %v182
      %v572 = vunpack.c.l.b16 %v183
      %v573 = vunpack.c.l.b16 %v184
      %v574 = vunpack.c.l.b16 %v185
      %v575 = vunpack.c.l.b16 %v186
      %v576 = vunpack.c.l.b16 %v187
      %v577 = vunpack.c.l.b16 %v188
      %v578 = vunpack.c.l.b16 %v189
      %v579 = vunpack.c.l.b16 %v190
      %v580 = vunpack.c.l.b16 %v191
      %v581 = vunpack.c.l.b16 %v192
      %v582 = vunpack.c.l.b16 %v193
      %v583 = vunpack.c.l.b16 %v194
      %v584 = vunpack.c.l.b16 %v195
      %v585 = vunpack.c.l.b16 %v196
      %v586 = vunpack.c.l.b16 %v197
      %v587 = vunpack.c.l.b16 %v198
      %v588 = vunpack.c.l.b16 %v199
      %v589 = vunpack.c.l.b16 %v200
      %v590 = vunpack.c.l.b16 %v201
      %v591 = vunpack.c.l.b16 %v202
      %v592 = vunpack.c.l.b16 %v203
      %v593 = vunpack.c.l.b16 %v204
      %v594 = vunpack.c.l.b16 %v205
      %v595 = vunpack.c.l.b16 %v206
      %v596 = vunpack.c.l.b16 %v207
      %v597 = vunpack.c.l.b16 %v208
      %v598 = vunpack.c.l.b16 %v209
      %v599 = vunpack.c.l.b16 %v210
      %v600 = vunpack.c.l.b16 %v211
      %v601 = vunpack.c.l.b16 %v212
      %v602 = vunpack.c.l.b16 %v213
      %v603 = vunpack.c.l.b16 %v214
      %v604 = vunpack.c.l.b16 %v215
      %v605 = vunpack.c.l.b16 %v216
      %v606 = vunpack.c.l.b16 %v217
      %v607 = vunpack.c.l.b16 %v218
      %v608 = vunpack.c.l.b16 %v219
      %v609 = vunpack.c.l.b16 %v220
      %v610 = vunpack.c.l.b16 %v221
      %v611 = vunpack.c.l.b16 %v222
      %v612 = vunpack.c.l.b16 %v223
      %v613 = vunpack.c.l.b16 %v224
      %v614 = vunpack.c.l.b16 %v225
      %v615 = vunpack.c.l.b16 %v226
      %v616 = vunpack.c.l.b16 %v227
      %v617 = vunpack.c.l.b16 %v228
      %v618 = vunpack.c.l.b16 %v229
      %v619 = vunpack.c.l.b16 %v230
      %v620 = vunpack.c.l.b16 %v231
      %v621 = vunpack.c.l.b16 %v232
      %v622 = vunpack.c.l.b16 %v233
      %v623 = vunpack.c.l.b16 %v234
      %v624 = vunpack.c.l.b16 %v235
      %v625 = vunpack.c.l.b16 %v236
      %v626 = vunpack.c.l.b16 %v237
      %v627 = vunpack.c.l.b16 %v238
      %v628 = vunpack.c.l.b16 %v239
      %v629 = vunpack.c.l.b16 %v240
      %v630 = vunpack.c.l.b16 %v241
      %v631 = vunpack.c.l.b16 %v242
      %v632 = vunpack.c.l.b16 %v243
      %v633 = vunpack.c.l.b16 %v244
      %v634 = vunpack.c.l.b16 %v245
      %v635 = vunpack.c.l.b16 %v246
      %v636 = vunpack.c.l.b16 %v247
      %v637 = vunpack.c.l.b16 %v248
      %v638 = vunpack.c.l.b16 %v249
      %v639 = vunpack.c.l.b16 %v250
      %v640 = vunpack.c.l.b16 %v251
      %v641 = vunpack.c.l.b16 %v252
      %v642 = vunpack.c.l.b16 %v253
      %v643 = vunpack.c.l.b16 %v254
      %v644 = vunpack.c.l.b16 %v255
      %v645 = vunpack.c.l.b16 %v256
      %v646 = vunpack.c.l.b16 %v257
      %v647 = vunpack.c.l.b16 %v258
      %v648 = vunpack.c.l.b16 %v259
      %v649 = vunpack.c.l.b16 %v260
      %v650 = vunpack.c.l.b16 %v261
      %v651 = vunpack.c.l.b16 %v262
      %v652 = vunpack.c.l.b16 %v263
      %v653 = vunpack.c.l.b16 %v264
      %v654 = vunpack.c.l.b16 %v265
      %v655 = vunpack.c.l.b16 %v266
      %v656 = vunpack.c.l.b16 %v267
      %v657 = vunpack.c.l.b16 %v268
      %v658 = vunpack.c.l.b16 %v269
      %v659 = vunpack.c.l.b16 %v270
      %v660 = vunpack.c.l.b16 %v271
      %v661 = vunpack.c.l.b16 %v272
      %v662 = vunpack.c.l.b16 %v273
      %v663 = vunpack.c.l.b16 %v274
      %v664 = vunpack.c.l.b16 %v275
      %v665 = vunpack.c.l.b16 %v276
      %v666 = vunpack.c.l.b16 %v277
      %v667 = vunpack.c.l.b16 %v278
      %v668 = vunpack.c.l.b16 %v279
      %v669 = vunpack.c.l.b16 %v280
      %v670 = vunpack.c.l.b16 %v281
      %v671 = vunpack.c.l.b16 %v282
      %v672 = vunpack.c.l.b16 %v283
      %v673 = vunpack.c.l.b16 %v284
      %v674 = vunpack.c.l.b16 %v285
      %v675 = vunpack.c.l.b16 %v286
      %v676 = vunpack.c.l.b16 %v287
      %v677 = vunpack.c.l.b16 %v288
      %v678 = vunpack.c.l.b16 %v289
      %v679 = vunpack.c.l.b16 %v290
      %v680 = vunpack.c.l.b16 %v291
      %v681 = vunpack.c.l.b16 %v292
      %v682 = vunpack.c.l.b16 %v293
      %v683 = vunpack.c.l.b16 %v294
      %v684 = vunpack.c.l.b16 %v295
      %v685 = vunpack.c.l.b16 %v296
      %v686 = vunpack.c.l.b16 %v297
      %v687 = vunpack.c.l.b16 %v298
      %v688 = vunpack.c.l.b16 %v299
      %v689 = vunpack.c.l.b16 %v300
      %v690 = vunpack.c.l.b16 %v301
      %v691 = vunpack.c.l.b16 %v302
      %v692 = vunpack.c.l.b16 %v303
      %v693 = vunpack.c.l.b16 %v304
      %v694 = vunpack.c.l.b16 %v305
      %v695 = vunpack.c.l.b16 %v306
      %v696 = vunpack.c.l.b16 %v307
      %v697 = vunpack.c.l.b16 %v308
      %v698 = vunpack.c.l.b16 %v309
      %v699 = vunpack.c.l.b16 %v310
      %v700 = vunpack.c.l.b16 %v311
      %v701 = vunpack.c.l.b16 %v312
      %v702 = vunpack.c.l.b16 %v313
      %v703 = vunpack.c.l.b16 %v314
      %v704 = vunpack.c.l.b16 %v315
      %v705 = vunpack.c.l.b16 %v316
      %v706 = vunpack.c.l.b16 %v317
      %v707 = vunpack.c.l.b16 %v318
      %v708 = vunpack.c.l.b16 %v319
      %v709 = vunpack.c.l.b16 %v320
      %v710 = vunpack.c.l.b16 %v321
      %v711 = vunpack.c.l.b16 %v322
      %v712 = vunpack.c.l.b16 %v323
      %v713 = vunpack.c.l.b16 %v324
      %v714 = vunpack.c.l.b16 %v325
      %v715 = vunpack.c.l.b16 %v326
      %v716 = vunpack.c.l.b16 %v327
      %v717 = vunpack.c.l.b16 %v328
      %v718 = vunpack.c.l.b16 %v329
      %v719 = vunpack.c.l.b16 %v330
      %v720 = vunpack.c.l.b16 %v331
      %v721 = vunpack.c.l.b16 %v332
      %v722 = vunpack.c.l.b16 %v333
      %v723 = vunpack.c.l.b16 %v334
      %v724 = vunpack.c.l.b16 %v335
      %v725 = vunpack.c.l.b16 %v336
      %v726 = vunpack.c.l.b16 %v337
      %v727 = vunpack.c.l.b16 %v338
      %v728 = vunpack.c.l.b16 %v339
      %v729 = vunpack.c.l.b16 %v340
      %v730 = vunpack.c.l.b16 %v341
      %v731 = vunpack.c.l.b16 %v342
      %v732 = vunpack.c.l.b16 %v343
      %v733 = vunpack.c.l.b16 %v344
      %v734 = vunpack.c.l.b16 %v345
      %v735 = vunpack.c.l.b16 %v346
      %v736 = vunpack.c.l.b16 %v347
      %v737 = vunpack.c.l.b16 %v348
      %v738 = vunpack.c.l.b16 %v349
      %v739 = vunpack.c.l.b16 %v350
      %v740 = vunpack.c.l.b16 %v351
      %v741 = vunpack.c.l.b16 %v352
      %v742 = vunpack.c.l.b16 %v353
      %v743 = vunpack.c.l.b16 %v354
      %v744 = vunpack.c.l.b16 %v355
      %v745 = vunpack.c.l.b16 %v356
      %v746 = vunpack.c.l.b16 %v357
      %v747 = vunpack.c.l.b16 %v358
      %v748 = vunpack.c.l.b16 %v359
      %v749 = vunpack.c.l.b16 %v360
      %v750 = vunpack.c.l.b16 %v361
      %v751 = vunpack.c.l.b16 %v362
      %v752 = vunpack.c.l.b16 %v363
      %v753 = vpack.c.b16 %v562, %v561
      %v754 = vpack.c.b16 %v564, %v563
      %v755 = vpack.c.b16 %v566, %v565
      %v756 = vpack.c.b16 %v568, %v567
      %v757 = vpack.c.b16 %v570, %v569
      %v758 = vpack.c.b16 %v572, %v571
      %v759 = vpack.c.b16 %v574, %v573
      %v760 = vpack.c.b16 %v576, %v575
      %v761 = vpack.c.b16 %v578, %v577
      %v762 = vpack.c.b16 %v580, %v579
      %v763 = vpack.c.b16 %v582, %v581
      %v764 = vpack.c.b16 %v584, %v583
      %v765 = vpack.c.b16 %v586, %v585
      %v766 = vpack.c.b16 %v588, %v587
      %v767 = vpack.c.b16 %v590, %v589
      %v768 = vpack.c.b16 %v592, %v591
      %v769 = vpack.c.b16 %v594, %v593
      %v770 = vpack.c.b16 %v596, %v595
      %v771 = vpack.c.b16 %v598, %v597
      %v772 = vpack.c.b16 %v600, %v599
      %v773 = vpack.c.b16 %v602, %v601
      %v774 = vpack.c.b16 %v604, %v603
      %v775 = vpack.c.b16 %v606, %v605
      %v776 = vpack.c.b16 %v608, %v607
      %v777 = vpack.c.b16 %v610, %v609
      %v778 = vpack.c.b16 %v612, %v611
      %v779 = vpack.c.b16 %v614, %v613
      %v780 = vpack.c.b16 %v616, %v615
      %v781 = vpack.c.b16 %v618, %v617
      %v782 = vpack.c.b16 %v620, %v619
      %v783 = vpack.c.b16 %v622, %v621
      %v784 = vpack.c.b16 %v624, %v623
      %v785 = vpack.c.b16 %v626, %v625
      %v786 = vpack.c.b16 %v628, %v627
      %v787 = vpack.c.b16 %v630, %v629
      %v788 = vpack.c.b16 %v632, %v631
      %v789 = vpack.c.b16 %v634, %v633
      %v790 = vpack.c.b16 %v636, %v635
      %v791 = vpack.c.b16 %v638, %v637
      %v792 = vpack.c.b16 %v640, %v639
      %v793 = vpack.c.b16 %v642, %v641
      %v794 = vpack.c.b16 %v644, %v643
      %v795 = vpack.c.b16 %v646, %v645
      %v796 = vpack.c.b16 %v648, %v647
      %v797 = vpack.c.b16 %v650, %v649
      %v798 = vpack.c.b16 %v652, %v651
      %v799 = vpack.c.b16 %v654, %v653
      %v800 = vpack.c.b16 %v656, %v655
      %v801 = vpack.c.b16 %v658, %v657
      %v802 = vpack.c.b16 %v660, %v659
      %v803 = vpack.c.b16 %v662, %v661
      %v804 = vpack.c.b16 %v664, %v663
      %v805 = vpack.c.b16 %v666, %v665
      %v806 = vpack.c.b16 %v668, %v667
      %v807 = vpack.c.b16 %v670, %v669
      %v808 = vpack.c.b16 %v672, %v671
      %v809 = vpack.c.b16 %v674, %v673
      %v810 = vpack.c.b16 %v676, %v675
      %v811 = vpack.c.b16 %v678, %v677
      %v812 = vpack.c.b16 %v680, %v679
      %v813 = vpack.c.b16 %v682, %v681
      %v814 = vpack.c.b16 %v684, %v683
      %v815 = vpack.c.b16 %v686, %v685
      %v816 = vpack.c.b16 %v688, %v687
      %v817 = vpack.c.b16 %v690, %v689
      %v818 = vpack.c.b16 %v692, %v691
      %v819 = vpack.c.b16 %v694, %v693
      %v820 = vpack.c.b16 %v696, %v695
      %v821 = vpack.c.b16 %v698, %v697
      %v822 = vpack.c.b16 %v700, %v699
      %v823 = vpack.c.b16 %v702, %v701
      %v824 = vpack.c.b16 %v704, %v703
      %v825 = vpack.c.b16 %v706, %v705
      %v826 = vpack.c.b16 %v708, %v707
      %v827 = vpack.c.b16 %v710, %v709
      %v828 = vpack.c.b16 %v712, %v711
      %v829 = vpack.c.b16 %v714, %v713
      %v830 = vpack.c.b16 %v716, %v715
      %v831 = vpack.c.b16 %v718, %v717
      %v832 = vpack.c.b16 %v720, %v719
      %v833 = vpack.c.b16 %v722, %v721
      %v834 = vpack.c.b16 %v724, %v723
      %v835 = vpack.c.b16 %v726, %v725
      %v836 = vpack.c.b16 %v728, %v727
      %v837 = vpack.c.b16 %v730, %v729
      %v838 = vpack.c.b16 %v732, %v731
      %v839 = vpack.c.b16 %v734, %v733
      %v840 = vpack.c.b16 %v736, %v735
      %v841 = vpack.c.b16 %v738, %v737
      %v842 = vpack.c.b16 %v740, %v739
      %v843 = vpack.c.b16 %v742, %v741
      %v844 = vpack.c.b16 %v744, %v743
      %v845 = vpack.c.b16 %v746, %v745
      %v846 = vpack.c.b16 %v748, %v747
      %v847 = vpack.c.b16 %v750, %v749
      %v848 = vpack.c.b16 %v752, %v751
      %vm849 = vcmask 31744
      %v851 = vsel %vm849, %v753, 0
      %v854 = vsel %vm849, %v754, 0
      %v857 = vsel %vm849, %v755, 0
      %v860 = vsel %vm849, %v756, 0
      %v863 = vsel %vm849, %v757, 0
      %v866 = vsel %vm849, %v758, 0
      %v869 = vsel %vm849, %v759, 0
      %v872 = vsel %vm849, %v760, 0
      %v875 = vsel %vm849, %v761, 0
      %v878 = vsel %vm849, %v762, 0
      %v881 = vsel %vm849, %v763, 0
      %v884 = vsel %vm849, %v764, 0
      %v887 = vsel %vm849, %v765, 0
      %v890 = vsel %vm849, %v766, 0
      %v893 = vsel %vm849, %v767, 0
      %v896 = vsel %vm849, %v768, 0
      %v899 = vsel %vm849, %v769, 0
      %v902 = vsel %vm849, %v770, 0
      %v905 = vsel %vm849, %v771, 0
      %v908 = vsel %vm849, %v772, 0
      %v911 = vsel %vm849, %v773, 0
      %v914 = vsel %vm849, %v774, 0
      %v917 = vsel %vm849, %v775, 0
      %v920 = vsel %vm849, %v776, 0
      %v923 = vsel %vm849, %v777, 0
      %v926 = vsel %vm849, %v778, 0
      %v929 = vsel %vm849, %v779, 0
      %v932 = vsel %vm849, %v780, 0
      %v935 = vsel %vm849, %v781, 0
      %v938 = vsel %vm849, %v782, 0
      %v941 = vsel %vm849, %v783, 0
      %v944 = vsel %vm849, %v784, 0
      %v947 = vsel %vm849, %v785, 0
      %v950 = vsel %vm849, %v786, 0
      %v953 = vsel %vm849, %v787, 0
      %v956 = vsel %vm849, %v788, 0
      %v959 = vsel %vm849, %v789, 0
      %v962 = vsel %vm849, %v790, 0
      %v965 = vsel %vm849, %v791, 0
      %v968 = vsel %vm849, %v792, 0
      %v971 = vsel %vm849, %v793, 0
      %v974 = vsel %vm849, %v794, 0
      %v977 = vsel %vm849, %v795, 0
      %v980 = vsel %vm849, %v796, 0
      %v983 = vsel %vm849, %v797, 0
      %v986 = vsel %vm849, %v798, 0
      %v989 = vsel %vm849, %v799, 0
      %v992 = vsel %vm849, %v800, 0
      %v995 = vsel %vm849, %v801, 0
      %v998 = vsel %vm849, %v802, 0
      %v1001 = vsel %vm849, %v803, 0
      %v1004 = vsel %vm849, %v804, 0
      %v1007 = vsel %vm849, %v805, 0
      %v1010 = vsel %vm849, %v806, 0
      %v1013 = vsel %vm849, %v807, 0
      %v1016 = vsel %vm849, %v808, 0
      %v1019 = vsel %vm849, %v809, 0
      %v1022 = vsel %vm849, %v810, 0
      %v1025 = vsel %vm849, %v811, 0
      %v1028 = vsel %vm849, %v812, 0
      %v1031 = vsel %vm849, %v813, 0
      %v1034 = vsel %vm849, %v814, 0
      %v1037 = vsel %vm849, %v815, 0
      %v1040 = vsel %vm849, %v816, 0
      %v1043 = vsel %vm849, %v817, 0
      %v1046 = vsel %vm849, %v818, 0
      %v1049 = vsel %vm849, %v819, 0
      %v1052 = vsel %vm849, %v820, 0
      %v1055 = vsel %vm849, %v821, 0
      %v1058 = vsel %vm849, %v822, 0
      %v1061 = vsel %vm849, %v823, 0
      %v1064 = vsel %vm849, %v824, 0
      %v1067 = vsel %vm849, %v825, 0
      %v1070 = vsel %vm849, %v826, 0
      %v1073 = vsel %vm849, %v827, 0
      %v1076 = vsel %vm849, %v828, 0
      %v1079 = vsel %vm849, %v829, 0
      %v1082 = vsel %vm849, %v830, 0
      %v1085 = vsel %vm849, %v831, 0
      %v1088 = vsel %vm849, %v832, 0
      %v1091 = vsel %vm849, %v833, 0
      %v1094 = vsel %vm849, %v834, 0
      %v1097 = vsel %vm849, %v835, 0
      %v1100 = vsel %vm849, %v836, 0
      %v1103 = vsel %vm849, %v837, 0
      %v1106 = vsel %vm849, %v838, 0
      %v1109 = vsel %vm849, %v839, 0
      %v1112 = vsel %vm849, %v840, 0
      %v1115 = vsel %vm849, %v841, 0
      %v1118 = vsel %vm849, %v842, 0
      %v1121 = vsel %vm849, %v843, 0
      %v1124 = vsel %vm849, %v844, 0
      %v1127 = vsel %vm849, %v845, 0
      %v1130 = vsel %vm849, %v846, 0
      %v1133 = vsel %vm849, %v847, 0
      %v1136 = vsel %vm849, %v848, 0
      %vm1138 = vcmask 1041408
      %v1140 = vsel %vm1138, %v364, 0
      %1142 = vmatpush.bf16.msra.mxu0 0
      %1143 = vmatpush.bf16.msra.mxu0 0
      %1144 = vmatpush.bf16.msra.mxu0 0
      %1145 = vmatpush.bf16.msra.mxu0 0
      %1146 = vmatpush.bf16.msra.mxu0 0
      %1147 = vmatpush.bf16.msra.mxu0 0
      %1148 = vmatpush.bf16.msra.mxu0 0
      %1149 = vmatpush.bf16.msra.mxu0 %v1140
      %1150 = vmatmul.bf16.gmra.mxu0 %v851
      %v1151 = vpop.f32.mrf.mxu0
      %v1152 = vadd.f32 %v367, %v1151
      %v1153 = vpop.f32.mrf.mxu0
      %v1154 = vadd.f32 %v367, %v1153
      %1155 = vmatmul.bf16.gmra.mxu0 %v854
      %v1156 = vpop.f32.mrf.mxu0
      %v1157 = vadd.f32 %v367, %v1156
      %v1158 = vpop.f32.mrf.mxu0
      %v1159 = vadd.f32 %v367, %v1158
      %1160 = vmatmul.bf16.gmra.mxu0 %v857
      %v1161 = vpop.f32.mrf.mxu0
      %v1162 = vadd.f32 %v367, %v1161
      %v1163 = vpop.f32.mrf.mxu0
      %v1164 = vadd.f32 %v367, %v1163
      %1165 = vmatmul.bf16.gmra.mxu0 %v860
      %v1166 = vpop.f32.mrf.mxu0
      %v1167 = vadd.f32 %v367, %v1166
      %v1168 = vpop.f32.mrf.mxu0
      %v1169 = vadd.f32 %v367, %v1168
      %1170 = vmatmul.bf16.gmra.mxu0 %v863
      %v1171 = vpop.f32.mrf.mxu0
      %v1172 = vadd.f32 %v367, %v1171
      %v1173 = vpop.f32.mrf.mxu0
      %v1174 = vadd.f32 %v367, %v1173
      %1175 = vmatmul.bf16.gmra.mxu0 %v866
      %v1176 = vpop.f32.mrf.mxu0
      %v1177 = vadd.f32 %v367, %v1176
      %v1178 = vpop.f32.mrf.mxu0
      %v1179 = vadd.f32 %v367, %v1178
      %1180 = vmatmul.bf16.gmra.mxu0 %v869
      %v1181 = vpop.f32.mrf.mxu0
      %v1182 = vadd.f32 %v367, %v1181
      %v1183 = vpop.f32.mrf.mxu0
      %v1184 = vadd.f32 %v367, %v1183
      %1185 = vmatmul.bf16.gmra.mxu0 %v872
      %v1186 = vpop.f32.mrf.mxu0
      %v1187 = vadd.f32 %v367, %v1186
      %v1188 = vpop.f32.mrf.mxu0
      %v1189 = vadd.f32 %v367, %v1188
      %1190 = vmatmul.bf16.gmra.mxu0 %v875
      %v1191 = vpop.f32.mrf.mxu0
      %v1192 = vadd.f32 %v367, %v1191
      %v1193 = vpop.f32.mrf.mxu0
      %v1194 = vadd.f32 %v367, %v1193
      %1195 = vmatmul.bf16.gmra.mxu0 %v878
      %v1196 = vpop.f32.mrf.mxu0
      %v1197 = vadd.f32 %v367, %v1196
      %v1198 = vpop.f32.mrf.mxu0
      %v1199 = vadd.f32 %v367, %v1198
      %1200 = vmatmul.bf16.gmra.mxu0 %v881
      %v1201 = vpop.f32.mrf.mxu0
      %v1202 = vadd.f32 %v367, %v1201
      %v1203 = vpop.f32.mrf.mxu0
      %v1204 = vadd.f32 %v367, %v1203
      %1205 = vmatmul.bf16.gmra.mxu0 %v884
      %v1206 = vpop.f32.mrf.mxu0
      %v1207 = vadd.f32 %v367, %v1206
      %v1208 = vpop.f32.mrf.mxu0
      %v1209 = vadd.f32 %v367, %v1208
      %1210 = vmatmul.bf16.gmra.mxu0 %v887
      %v1211 = vpop.f32.mrf.mxu0
      %v1212 = vadd.f32 %v367, %v1211
      %v1213 = vpop.f32.mrf.mxu0
      %v1214 = vadd.f32 %v367, %v1213
      %1215 = vmatmul.bf16.gmra.mxu0 %v890
      %v1216 = vpop.f32.mrf.mxu0
      %v1217 = vadd.f32 %v367, %v1216
      %v1218 = vpop.f32.mrf.mxu0
      %v1219 = vadd.f32 %v367, %v1218
      %1220 = vmatmul.bf16.gmra.mxu0 %v893
      %v1221 = vpop.f32.mrf.mxu0
      %v1222 = vadd.f32 %v367, %v1221
      %v1223 = vpop.f32.mrf.mxu0
      %v1224 = vadd.f32 %v367, %v1223
      %1225 = vmatmul.bf16.gmra.mxu0 %v896
      %v1226 = vpop.f32.mrf.mxu0
      %v1227 = vadd.f32 %v367, %v1226
      %v1228 = vpop.f32.mrf.mxu0
      %v1229 = vadd.f32 %v367, %v1228
      %1230 = vmatmul.bf16.gmra.mxu0 %v899
      %v1231 = vpop.f32.mrf.mxu0
      %v1232 = vadd.f32 %v367, %v1231
      %v1233 = vpop.f32.mrf.mxu0
      %v1234 = vadd.f32 %v367, %v1233
      %1235 = vmatmul.bf16.gmra.mxu0 %v902
      %v1236 = vpop.f32.mrf.mxu0
      %v1237 = vadd.f32 %v367, %v1236
      %v1238 = vpop.f32.mrf.mxu0
      %v1239 = vadd.f32 %v367, %v1238
      %1240 = vmatmul.bf16.gmra.mxu0 %v905
      %v1241 = vpop.f32.mrf.mxu0
      %v1242 = vadd.f32 %v367, %v1241
      %v1243 = vpop.f32.mrf.mxu0
      %v1244 = vadd.f32 %v367, %v1243
      %1245 = vmatmul.bf16.gmra.mxu0 %v908
      %v1246 = vpop.f32.mrf.mxu0
      %v1247 = vadd.f32 %v367, %v1246
      %v1248 = vpop.f32.mrf.mxu0
      %v1249 = vadd.f32 %v367, %v1248
      %1250 = vmatmul.bf16.gmra.mxu0 %v911
      %v1251 = vpop.f32.mrf.mxu0
      %v1252 = vadd.f32 %v367, %v1251
      %v1253 = vpop.f32.mrf.mxu0
      %v1254 = vadd.f32 %v367, %v1253
      %1255 = vmatmul.bf16.gmra.mxu0 %v914
      %v1256 = vpop.f32.mrf.mxu0
      %v1257 = vadd.f32 %v367, %v1256
      %v1258 = vpop.f32.mrf.mxu0
      %v1259 = vadd.f32 %v367, %v1258
      %1260 = vmatmul.bf16.gmra.mxu0 %v917
      %v1261 = vpop.f32.mrf.mxu0
      %v1262 = vadd.f32 %v367, %v1261
      %v1263 = vpop.f32.mrf.mxu0
      %v1264 = vadd.f32 %v367, %v1263
      %1265 = vmatmul.bf16.gmra.mxu0 %v920
      %v1266 = vpop.f32.mrf.mxu0
      %v1267 = vadd.f32 %v367, %v1266
      %v1268 = vpop.f32.mrf.mxu0
      %v1269 = vadd.f32 %v367, %v1268
      %1270 = vmatmul.bf16.gmra.mxu0 %v923
      %v1271 = vpop.f32.mrf.mxu0
      %v1272 = vadd.f32 %v367, %v1271
      %v1273 = vpop.f32.mrf.mxu0
      %v1274 = vadd.f32 %v367, %v1273
      %1275 = vmatmul.bf16.gmra.mxu0 %v926
      %v1276 = vpop.f32.mrf.mxu0
      %v1277 = vadd.f32 %v367, %v1276
      %v1278 = vpop.f32.mrf.mxu0
      %v1279 = vadd.f32 %v367, %v1278
      %1280 = vmatmul.bf16.gmra.mxu0 %v929
      %v1281 = vpop.f32.mrf.mxu0
      %v1282 = vadd.f32 %v367, %v1281
      %v1283 = vpop.f32.mrf.mxu0
      %v1284 = vadd.f32 %v367, %v1283
      %1285 = vmatmul.bf16.gmra.mxu0 %v932
      %v1286 = vpop.f32.mrf.mxu0
      %v1287 = vadd.f32 %v367, %v1286
      %v1288 = vpop.f32.mrf.mxu0
      %v1289 = vadd.f32 %v367, %v1288
      %1290 = vmatmul.bf16.gmra.mxu0 %v935
      %v1291 = vpop.f32.mrf.mxu0
      %v1292 = vadd.f32 %v367, %v1291
      %v1293 = vpop.f32.mrf.mxu0
      %v1294 = vadd.f32 %v367, %v1293
      %1295 = vmatmul.bf16.gmra.mxu0 %v938
      %v1296 = vpop.f32.mrf.mxu0
      %v1297 = vadd.f32 %v367, %v1296
      %v1298 = vpop.f32.mrf.mxu0
      %v1299 = vadd.f32 %v367, %v1298
      %1300 = vmatmul.bf16.gmra.mxu0 %v941
      %v1301 = vpop.f32.mrf.mxu0
      %v1302 = vadd.f32 %v367, %v1301
      %v1303 = vpop.f32.mrf.mxu0
      %v1304 = vadd.f32 %v367, %v1303
      %1305 = vmatmul.bf16.gmra.mxu0 %v944
      %v1306 = vpop.f32.mrf.mxu0
      %v1307 = vadd.f32 %v367, %v1306
      %v1308 = vpop.f32.mrf.mxu0
      %v1309 = vadd.f32 %v367, %v1308
      %1310 = vmatmul.bf16.gmra.mxu0 %v947
      %v1311 = vpop.f32.mrf.mxu0
      %v1312 = vadd.f32 %v367, %v1311
      %v1313 = vpop.f32.mrf.mxu0
      %v1314 = vadd.f32 %v367, %v1313
      %1315 = vmatmul.bf16.gmra.mxu0 %v950
      %v1316 = vpop.f32.mrf.mxu0
      %v1317 = vadd.f32 %v367, %v1316
      %v1318 = vpop.f32.mrf.mxu0
      %v1319 = vadd.f32 %v367, %v1318
      %1320 = vmatmul.bf16.gmra.mxu0 %v953
      %v1321 = vpop.f32.mrf.mxu0
      %v1322 = vadd.f32 %v367, %v1321
      %v1323 = vpop.f32.mrf.mxu0
      %v1324 = vadd.f32 %v367, %v1323
      %1325 = vmatmul.bf16.gmra.mxu0 %v956
      %v1326 = vpop.f32.mrf.mxu0
      %v1327 = vadd.f32 %v367, %v1326
      %v1328 = vpop.f32.mrf.mxu0
      %v1329 = vadd.f32 %v367, %v1328
      %1330 = vmatmul.bf16.gmra.mxu0 %v959
      %v1331 = vpop.f32.mrf.mxu0
      %v1332 = vadd.f32 %v367, %v1331
      %v1333 = vpop.f32.mrf.mxu0
      %v1334 = vadd.f32 %v367, %v1333
      %1335 = vmatmul.bf16.gmra.mxu0 %v962
      %v1336 = vpop.f32.mrf.mxu0
      %v1337 = vadd.f32 %v367, %v1336
      %v1338 = vpop.f32.mrf.mxu0
      %v1339 = vadd.f32 %v367, %v1338
      %1340 = vmatmul.bf16.gmra.mxu0 %v965
      %v1341 = vpop.f32.mrf.mxu0
      %v1342 = vadd.f32 %v367, %v1341
      %v1343 = vpop.f32.mrf.mxu0
      %v1344 = vadd.f32 %v367, %v1343
      %1345 = vmatmul.bf16.gmra.mxu0 %v968
      %v1346 = vpop.f32.mrf.mxu0
      %v1347 = vadd.f32 %v367, %v1346
      %v1348 = vpop.f32.mrf.mxu0
      %v1349 = vadd.f32 %v367, %v1348
      %1350 = vmatmul.bf16.gmra.mxu0 %v971
      %v1351 = vpop.f32.mrf.mxu0
      %v1352 = vadd.f32 %v367, %v1351
      %v1353 = vpop.f32.mrf.mxu0
      %v1354 = vadd.f32 %v367, %v1353
      %1355 = vmatmul.bf16.gmra.mxu0 %v974
      %v1356 = vpop.f32.mrf.mxu0
      %v1357 = vadd.f32 %v367, %v1356
      %v1358 = vpop.f32.mrf.mxu0
      %v1359 = vadd.f32 %v367, %v1358
      %1360 = vmatmul.bf16.gmra.mxu0 %v977
      %v1361 = vpop.f32.mrf.mxu0
      %v1362 = vadd.f32 %v367, %v1361
      %v1363 = vpop.f32.mrf.mxu0
      %v1364 = vadd.f32 %v367, %v1363
      %1365 = vmatmul.bf16.gmra.mxu0 %v980
      %v1366 = vpop.f32.mrf.mxu0
      %v1367 = vadd.f32 %v367, %v1366
      %v1368 = vpop.f32.mrf.mxu0
      %v1369 = vadd.f32 %v367, %v1368
      %1370 = vmatmul.bf16.gmra.mxu0 %v983
      %v1371 = vpop.f32.mrf.mxu0
      %v1372 = vadd.f32 %v367, %v1371
      %v1373 = vpop.f32.mrf.mxu0
      %v1374 = vadd.f32 %v367, %v1373
      %1375 = vmatmul.bf16.gmra.mxu0 %v986
      %v1376 = vpop.f32.mrf.mxu0
      %v1377 = vadd.f32 %v367, %v1376
      %v1378 = vpop.f32.mrf.mxu0
      %v1379 = vadd.f32 %v367, %v1378
      %1380 = vmatmul.bf16.gmra.mxu0 %v989
      %v1381 = vpop.f32.mrf.mxu0
      %v1382 = vadd.f32 %v367, %v1381
      %v1383 = vpop.f32.mrf.mxu0
      %v1384 = vadd.f32 %v367, %v1383
      %1385 = vmatmul.bf16.gmra.mxu0 %v992
      %v1386 = vpop.f32.mrf.mxu0
      %v1387 = vadd.f32 %v367, %v1386
      %v1388 = vpop.f32.mrf.mxu0
      %v1389 = vadd.f32 %v367, %v1388
      %1390 = vmatmul.bf16.gmra.mxu0 %v995
      %v1391 = vpop.f32.mrf.mxu0
      %v1392 = vadd.f32 %v367, %v1391
      %v1393 = vpop.f32.mrf.mxu0
      %v1394 = vadd.f32 %v367, %v1393
      %1395 = vmatmul.bf16.gmra.mxu0 %v998
      %v1396 = vpop.f32.mrf.mxu0
      %v1397 = vadd.f32 %v367, %v1396
      %v1398 = vpop.f32.mrf.mxu0
      %v1399 = vadd.f32 %v367, %v1398
      %1400 = vmatmul.bf16.gmra.mxu0 %v1001
      %v1401 = vpop.f32.mrf.mxu0
      %v1402 = vadd.f32 %v367, %v1401
      %v1403 = vpop.f32.mrf.mxu0
      %v1404 = vadd.f32 %v367, %v1403
      %1405 = vmatmul.bf16.gmra.mxu0 %v1004
      %v1406 = vpop.f32.mrf.mxu0
      %v1407 = vadd.f32 %v367, %v1406
      %v1408 = vpop.f32.mrf.mxu0
      %v1409 = vadd.f32 %v367, %v1408
      %1410 = vmatmul.bf16.gmra.mxu0 %v1007
      %v1411 = vpop.f32.mrf.mxu0
      %v1412 = vadd.f32 %v367, %v1411
      %v1413 = vpop.f32.mrf.mxu0
      %v1414 = vadd.f32 %v367, %v1413
      %1415 = vmatmul.bf16.gmra.mxu0 %v1010
      %v1416 = vpop.f32.mrf.mxu0
      %v1417 = vadd.f32 %v367, %v1416
      %v1418 = vpop.f32.mrf.mxu0
      %v1419 = vadd.f32 %v367, %v1418
      %1420 = vmatmul.bf16.gmra.mxu0 %v1013
      %v1421 = vpop.f32.mrf.mxu0
      %v1422 = vadd.f32 %v367, %v1421
      %v1423 = vpop.f32.mrf.mxu0
      %v1424 = vadd.f32 %v367, %v1423
      %1425 = vmatmul.bf16.gmra.mxu0 %v1016
      %v1426 = vpop.f32.mrf.mxu0
      %v1427 = vadd.f32 %v367, %v1426
      %v1428 = vpop.f32.mrf.mxu0
      %v1429 = vadd.f32 %v367, %v1428
      %1430 = vmatmul.bf16.gmra.mxu0 %v1019
      %v1431 = vpop.f32.mrf.mxu0
      %v1432 = vadd.f32 %v367, %v1431
      %v1433 = vpop.f32.mrf.mxu0
      %v1434 = vadd.f32 %v367, %v1433
      %1435 = vmatmul.bf16.gmra.mxu0 %v1022
      %v1436 = vpop.f32.mrf.mxu0
      %v1437 = vadd.f32 %v367, %v1436
      %v1438 = vpop.f32.mrf.mxu0
      %v1439 = vadd.f32 %v367, %v1438
      %1440 = vmatmul.bf16.gmra.mxu0 %v1025
      %v1441 = vpop.f32.mrf.mxu0
      %v1442 = vadd.f32 %v367, %v1441
      %v1443 = vpop.f32.mrf.mxu0
      %v1444 = vadd.f32 %v367, %v1443
      %1445 = vmatmul.bf16.gmra.mxu0 %v1028
      %v1446 = vpop.f32.mrf.mxu0
      %v1447 = vadd.f32 %v367, %v1446
      %v1448 = vpop.f32.mrf.mxu0
      %v1449 = vadd.f32 %v367, %v1448
      %1450 = vmatmul.bf16.gmra.mxu0 %v1031
      %v1451 = vpop.f32.mrf.mxu0
      %v1452 = vadd.f32 %v367, %v1451
      %v1453 = vpop.f32.mrf.mxu0
      %v1454 = vadd.f32 %v367, %v1453
      %1455 = vmatmul.bf16.gmra.mxu0 %v1034
      %v1456 = vpop.f32.mrf.mxu0
      %v1457 = vadd.f32 %v367, %v1456
      %v1458 = vpop.f32.mrf.mxu0
      %v1459 = vadd.f32 %v367, %v1458
      %1460 = vmatmul.bf16.gmra.mxu0 %v1037
      %v1461 = vpop.f32.mrf.mxu0
      %v1462 = vadd.f32 %v367, %v1461
      %v1463 = vpop.f32.mrf.mxu0
      %v1464 = vadd.f32 %v367, %v1463
      %1465 = vmatmul.bf16.gmra.mxu0 %v1040
      %v1466 = vpop.f32.mrf.mxu0
      %v1467 = vadd.f32 %v367, %v1466
      %v1468 = vpop.f32.mrf.mxu0
      %v1469 = vadd.f32 %v367, %v1468
      %1470 = vmatmul.bf16.gmra.mxu0 %v1043
      %v1471 = vpop.f32.mrf.mxu0
      %v1472 = vadd.f32 %v367, %v1471
      %v1473 = vpop.f32.mrf.mxu0
      %v1474 = vadd.f32 %v367, %v1473
      %1475 = vmatmul.bf16.gmra.mxu0 %v1046
      %v1476 = vpop.f32.mrf.mxu0
      %v1477 = vadd.f32 %v367, %v1476
      %v1478 = vpop.f32.mrf.mxu0
      %v1479 = vadd.f32 %v367, %v1478
      %1480 = vmatmul.bf16.gmra.mxu0 %v1049
      %v1481 = vpop.f32.mrf.mxu0
      %v1482 = vadd.f32 %v367, %v1481
      %v1483 = vpop.f32.mrf.mxu0
      %v1484 = vadd.f32 %v367, %v1483
      %1485 = vmatmul.bf16.gmra.mxu0 %v1052
      %v1486 = vpop.f32.mrf.mxu0
      %v1487 = vadd.f32 %v367, %v1486
      %v1488 = vpop.f32.mrf.mxu0
      %v1489 = vadd.f32 %v367, %v1488
      %1490 = vmatmul.bf16.gmra.mxu0 %v1055
      %v1491 = vpop.f32.mrf.mxu0
      %v1492 = vadd.f32 %v367, %v1491
      %v1493 = vpop.f32.mrf.mxu0
      %v1494 = vadd.f32 %v367, %v1493
      %1495 = vmatmul.bf16.gmra.mxu0 %v1058
      %v1496 = vpop.f32.mrf.mxu0
      %v1497 = vadd.f32 %v367, %v1496
      %v1498 = vpop.f32.mrf.mxu0
      %v1499 = vadd.f32 %v367, %v1498
      %1500 = vmatmul.bf16.gmra.mxu0 %v1061
      %v1501 = vpop.f32.mrf.mxu0
      %v1502 = vadd.f32 %v367, %v1501
      %v1503 = vpop.f32.mrf.mxu0
      %v1504 = vadd.f32 %v367, %v1503
      %1505 = vmatmul.bf16.gmra.mxu0 %v1064
      %v1506 = vpop.f32.mrf.mxu0
      %v1507 = vadd.f32 %v367, %v1506
      %v1508 = vpop.f32.mrf.mxu0
      %v1509 = vadd.f32 %v367, %v1508
      %1510 = vmatmul.bf16.gmra.mxu0 %v1067
      %v1511 = vpop.f32.mrf.mxu0
      %v1512 = vadd.f32 %v367, %v1511
      %v1513 = vpop.f32.mrf.mxu0
      %v1514 = vadd.f32 %v367, %v1513
      %1515 = vmatmul.bf16.gmra.mxu0 %v1070
      %v1516 = vpop.f32.mrf.mxu0
      %v1517 = vadd.f32 %v367, %v1516
      %v1518 = vpop.f32.mrf.mxu0
      %v1519 = vadd.f32 %v367, %v1518
      %1520 = vmatmul.bf16.gmra.mxu0 %v1073
      %v1521 = vpop.f32.mrf.mxu0
      %v1522 = vadd.f32 %v367, %v1521
      %v1523 = vpop.f32.mrf.mxu0
      %v1524 = vadd.f32 %v367, %v1523
      %1525 = vmatmul.bf16.gmra.mxu0 %v1076
      %v1526 = vpop.f32.mrf.mxu0
      %v1527 = vadd.f32 %v367, %v1526
      %v1528 = vpop.f32.mrf.mxu0
      %v1529 = vadd.f32 %v367, %v1528
      %1530 = vmatmul.bf16.gmra.mxu0 %v1079
      %v1531 = vpop.f32.mrf.mxu0
      %v1532 = vadd.f32 %v367, %v1531
      %v1533 = vpop.f32.mrf.mxu0
      %v1534 = vadd.f32 %v367, %v1533
      %1535 = vmatmul.bf16.gmra.mxu0 %v1082
      %v1536 = vpop.f32.mrf.mxu0
      %v1537 = vadd.f32 %v367, %v1536
      %v1538 = vpop.f32.mrf.mxu0
      %v1539 = vadd.f32 %v367, %v1538
      %1540 = vmatmul.bf16.gmra.mxu0 %v1085
      %v1541 = vpop.f32.mrf.mxu0
      %v1542 = vadd.f32 %v367, %v1541
      %v1543 = vpop.f32.mrf.mxu0
      %v1544 = vadd.f32 %v367, %v1543
      %1545 = vmatmul.bf16.gmra.mxu0 %v1088
      %v1546 = vpop.f32.mrf.mxu0
      %v1547 = vadd.f32 %v367, %v1546
      %v1548 = vpop.f32.mrf.mxu0
      %v1549 = vadd.f32 %v367, %v1548
      %1550 = vmatmul.bf16.gmra.mxu0 %v1091
      %v1551 = vpop.f32.mrf.mxu0
      %v1552 = vadd.f32 %v367, %v1551
      %v1553 = vpop.f32.mrf.mxu0
      %v1554 = vadd.f32 %v367, %v1553
      %1555 = vmatmul.bf16.gmra.mxu0 %v1094
      %v1556 = vpop.f32.mrf.mxu0
      %v1557 = vadd.f32 %v367, %v1556
      %v1558 = vpop.f32.mrf.mxu0
      %v1559 = vadd.f32 %v367, %v1558
      %1560 = vmatmul.bf16.gmra.mxu0 %v1097
      %v1561 = vpop.f32.mrf.mxu0
      %v1562 = vadd.f32 %v367, %v1561
      %v1563 = vpop.f32.mrf.mxu0
      %v1564 = vadd.f32 %v367, %v1563
      %1565 = vmatmul.bf16.gmra.mxu0 %v1100
      %v1566 = vpop.f32.mrf.mxu0
      %v1567 = vadd.f32 %v367, %v1566
      %v1568 = vpop.f32.mrf.mxu0
      %v1569 = vadd.f32 %v367, %v1568
      %1570 = vmatmul.bf16.gmra.mxu0 %v1103
      %v1571 = vpop.f32.mrf.mxu0
      %v1572 = vadd.f32 %v367, %v1571
      %v1573 = vpop.f32.mrf.mxu0
      %v1574 = vadd.f32 %v367, %v1573
      %1575 = vmatmul.bf16.gmra.mxu0 %v1106
      %v1576 = vpop.f32.mrf.mxu0
      %v1577 = vadd.f32 %v367, %v1576
      %v1578 = vpop.f32.mrf.mxu0
      %v1579 = vadd.f32 %v367, %v1578
      %1580 = vmatmul.bf16.gmra.mxu0 %v1109
      %v1581 = vpop.f32.mrf.mxu0
      %v1582 = vadd.f32 %v367, %v1581
      %v1583 = vpop.f32.mrf.mxu0
      %v1584 = vadd.f32 %v367, %v1583
      %1585 = vmatmul.bf16.gmra.mxu0 %v1112
      %v1586 = vpop.f32.mrf.mxu0
      %v1587 = vadd.f32 %v367, %v1586
      %v1588 = vpop.f32.mrf.mxu0
      %v1589 = vadd.f32 %v367, %v1588
      %1590 = vmatmul.bf16.gmra.mxu0 %v1115
      %v1591 = vpop.f32.mrf.mxu0
      %v1592 = vadd.f32 %v367, %v1591
      %v1593 = vpop.f32.mrf.mxu0
      %v1594 = vadd.f32 %v367, %v1593
      %1595 = vmatmul.bf16.gmra.mxu0 %v1118
      %v1596 = vpop.f32.mrf.mxu0
      %v1597 = vadd.f32 %v367, %v1596
      %v1598 = vpop.f32.mrf.mxu0
      %v1599 = vadd.f32 %v367, %v1598
      %1600 = vmatmul.bf16.gmra.mxu0 %v1121
      %v1601 = vpop.f32.mrf.mxu0
      %v1602 = vadd.f32 %v367, %v1601
      %v1603 = vpop.f32.mrf.mxu0
      %v1604 = vadd.f32 %v367, %v1603
      %1605 = vmatmul.bf16.gmra.mxu0 %v1124
      %v1606 = vpop.f32.mrf.mxu0
      %v1607 = vadd.f32 %v367, %v1606
      %v1608 = vpop.f32.mrf.mxu0
      %v1609 = vadd.f32 %v367, %v1608
      %1610 = vmatmul.bf16.gmra.mxu0 %v1127
      %v1611 = vpop.f32.mrf.mxu0
      %v1612 = vadd.f32 %v367, %v1611
      %v1613 = vpop.f32.mrf.mxu0
      %v1614 = vadd.f32 %v367, %v1613
      %1615 = vmatmul.bf16.gmra.mxu0 %v1130
      %v1616 = vpop.f32.mrf.mxu0
      %v1617 = vadd.f32 %v367, %v1616
      %v1618 = vpop.f32.mrf.mxu0
      %v1619 = vadd.f32 %v367, %v1618
      %1620 = vmatmul.bf16.gmra.mxu0 %v1133
      %v1621 = vpop.f32.mrf.mxu0
      %v1622 = vadd.f32 %v367, %v1621
      %v1623 = vpop.f32.mrf.mxu0
      %v1624 = vadd.f32 %v367, %v1623
      %1625 = vmatmul.bf16.gmra.mxu0 %v1136
      %v1626 = vpop.f32.mrf.mxu0
      %v1627 = vadd.f32 %v367, %v1626
      %v1628 = vpop.f32.mrf.mxu0
      %v1629 = vadd.f32 %v367, %v1628
      %1630 = vdwg.mxu0
      %v1631 = vmax.f32 %v1152, 0.0
      %v1632 = vmax.f32 %v1154, 0.0
      %v1633 = vmax.f32 %v1157, 0.0
      %v1634 = vmax.f32 %v1159, 0.0
      %v1635 = vmax.f32 %v1162, 0.0
      %v1636 = vmax.f32 %v1164, 0.0
      %v1637 = vmax.f32 %v1167, 0.0
      %v1638 = vmax.f32 %v1169, 0.0
      %v1639 = vmax.f32 %v1172, 0.0
      %v1640 = vmax.f32 %v1174, 0.0
      %v1641 = vmax.f32 %v1177, 0.0
      %v1642 = vmax.f32 %v1179, 0.0
      %v1643 = vmax.f32 %v1182, 0.0
      %v1644 = vmax.f32 %v1184, 0.0
      %v1645 = vmax.f32 %v1187, 0.0
      %v1646 = vmax.f32 %v1189, 0.0
      %v1647 = vmax.f32 %v1192, 0.0
      %v1648 = vmax.f32 %v1194, 0.0
      %v1649 = vmax.f32 %v1197, 0.0
      %v1650 = vmax.f32 %v1199, 0.0
      %v1651 = vmax.f32 %v1202, 0.0
      %v1652 = vmax.f32 %v1204, 0.0
      %v1653 = vmax.f32 %v1207, 0.0
      %v1654 = vmax.f32 %v1209, 0.0
      %v1655 = vmax.f32 %v1212, 0.0
      %v1656 = vmax.f32 %v1214, 0.0
      %v1657 = vmax.f32 %v1217, 0.0
      %v1658 = vmax.f32 %v1219, 0.0
      %v1659 = vmax.f32 %v1222, 0.0
      %v1660 = vmax.f32 %v1224, 0.0
      %v1661 = vmax.f32 %v1227, 0.0
      %v1662 = vmax.f32 %v1229, 0.0
      %v1663 = vmax.f32 %v1232, 0.0
      %v1664 = vmax.f32 %v1234, 0.0
      %v1665 = vmax.f32 %v1237, 0.0
      %v1666 = vmax.f32 %v1239, 0.0
      %v1667 = vmax.f32 %v1242, 0.0
      %v1668 = vmax.f32 %v1244, 0.0
      %v1669 = vmax.f32 %v1247, 0.0
      %v1670 = vmax.f32 %v1249, 0.0
      %v1671 = vmax.f32 %v1252, 0.0
      %v1672 = vmax.f32 %v1254, 0.0
      %v1673 = vmax.f32 %v1257, 0.0
      %v1674 = vmax.f32 %v1259, 0.0
      %v1675 = vmax.f32 %v1262, 0.0
      %v1676 = vmax.f32 %v1264, 0.0
      %v1677 = vmax.f32 %v1267, 0.0
      %v1678 = vmax.f32 %v1269, 0.0
      %v1679 = vmax.f32 %v1272, 0.0
      %v1680 = vmax.f32 %v1274, 0.0
      %v1681 = vmax.f32 %v1277, 0.0
      %v1682 = vmax.f32 %v1279, 0.0
      %v1683 = vmax.f32 %v1282, 0.0
      %v1684 = vmax.f32 %v1284, 0.0
      %v1685 = vmax.f32 %v1287, 0.0
      %v1686 = vmax.f32 %v1289, 0.0
      %v1687 = vmax.f32 %v1292, 0.0
      %v1688 = vmax.f32 %v1294, 0.0
      %v1689 = vmax.f32 %v1297, 0.0
      %v1690 = vmax.f32 %v1299, 0.0
      %v1691 = vmax.f32 %v1302, 0.0
      %v1692 = vmax.f32 %v1304, 0.0
      %v1693 = vmax.f32 %v1307, 0.0
      %v1694 = vmax.f32 %v1309, 0.0
      %v1695 = vmax.f32 %v1312, 0.0
      %v1696 = vmax.f32 %v1314, 0.0
      %v1697 = vmax.f32 %v1317, 0.0
      %v1698 = vmax.f32 %v1319, 0.0
      %v1699 = vmax.f32 %v1322, 0.0
      %v1700 = vmax.f32 %v1324, 0.0
      %v1701 = vmax.f32 %v1327, 0.0
      %v1702 = vmax.f32 %v1329, 0.0
      %v1703 = vmax.f32 %v1332, 0.0
      %v1704 = vmax.f32 %v1334, 0.0
      %v1705 = vmax.f32 %v1337, 0.0
      %v1706 = vmax.f32 %v1339, 0.0
      %v1707 = vmax.f32 %v1342, 0.0
      %v1708 = vmax.f32 %v1344, 0.0
      %v1709 = vmax.f32 %v1347, 0.0
      %v1710 = vmax.f32 %v1349, 0.0
      %v1711 = vmax.f32 %v1352, 0.0
      %v1712 = vmax.f32 %v1354, 0.0
      %v1713 = vmax.f32 %v1357, 0.0
      %v1714 = vmax.f32 %v1359, 0.0
      %v1715 = vmax.f32 %v1362, 0.0
      %v1716 = vmax.f32 %v1364, 0.0
      %v1717 = vmax.f32 %v1367, 0.0
      %v1718 = vmax.f32 %v1369, 0.0
      %v1719 = vmax.f32 %v1372, 0.0
      %v1720 = vmax.f32 %v1374, 0.0
      %v1721 = vmax.f32 %v1377, 0.0
      %v1722 = vmax.f32 %v1379, 0.0
      %v1723 = vmax.f32 %v1382, 0.0
      %v1724 = vmax.f32 %v1384, 0.0
      %v1725 = vmax.f32 %v1387, 0.0
      %v1726 = vmax.f32 %v1389, 0.0
      %v1727 = vmax.f32 %v1392, 0.0
      %v1728 = vmax.f32 %v1394, 0.0
      %v1729 = vmax.f32 %v1397, 0.0
      %v1730 = vmax.f32 %v1399, 0.0
      %v1731 = vmax.f32 %v1402, 0.0
      %v1732 = vmax.f32 %v1404, 0.0
      %v1733 = vmax.f32 %v1407, 0.0
      %v1734 = vmax.f32 %v1409, 0.0
      %v1735 = vmax.f32 %v1412, 0.0
      %v1736 = vmax.f32 %v1414, 0.0
      %v1737 = vmax.f32 %v1417, 0.0
      %v1738 = vmax.f32 %v1419, 0.0
      %v1739 = vmax.f32 %v1422, 0.0
      %v1740 = vmax.f32 %v1424, 0.0
      %v1741 = vmax.f32 %v1427, 0.0
      %v1742 = vmax.f32 %v1429, 0.0
      %v1743 = vmax.f32 %v1432, 0.0
      %v1744 = vmax.f32 %v1434, 0.0
      %v1745 = vmax.f32 %v1437, 0.0
      %v1746 = vmax.f32 %v1439, 0.0
      %v1747 = vmax.f32 %v1442, 0.0
      %v1748 = vmax.f32 %v1444, 0.0
      %v1749 = vmax.f32 %v1447, 0.0
      %v1750 = vmax.f32 %v1449, 0.0
      %v1751 = vmax.f32 %v1452, 0.0
      %v1752 = vmax.f32 %v1454, 0.0
      %v1753 = vmax.f32 %v1457, 0.0
      %v1754 = vmax.f32 %v1459, 0.0
      %v1755 = vmax.f32 %v1462, 0.0
      %v1756 = vmax.f32 %v1464, 0.0
      %v1757 = vmax.f32 %v1467, 0.0
      %v1758 = vmax.f32 %v1469, 0.0
      %v1759 = vmax.f32 %v1472, 0.0
      %v1760 = vmax.f32 %v1474, 0.0
      %v1761 = vmax.f32 %v1477, 0.0
      %v1762 = vmax.f32 %v1479, 0.0
      %v1763 = vmax.f32 %v1482, 0.0
      %v1764 = vmax.f32 %v1484, 0.0
      %v1765 = vmax.f32 %v1487, 0.0
      %v1766 = vmax.f32 %v1489, 0.0
      %v1767 = vmax.f32 %v1492, 0.0
      %v1768 = vmax.f32 %v1494, 0.0
      %v1769 = vmax.f32 %v1497, 0.0
      %v1770 = vmax.f32 %v1499, 0.0
      %v1771 = vmax.f32 %v1502, 0.0
      %v1772 = vmax.f32 %v1504, 0.0
      %v1773 = vmax.f32 %v1507, 0.0
      %v1774 = vmax.f32 %v1509, 0.0
      %v1775 = vmax.f32 %v1512, 0.0
      %v1776 = vmax.f32 %v1514, 0.0
      %v1777 = vmax.f32 %v1517, 0.0
      %v1778 = vmax.f32 %v1519, 0.0
      %v1779 = vmax.f32 %v1522, 0.0
      %v1780 = vmax.f32 %v1524, 0.0
      %v1781 = vmax.f32 %v1527, 0.0
      %v1782 = vmax.f32 %v1529, 0.0
      %v1783 = vmax.f32 %v1532, 0.0
      %v1784 = vmax.f32 %v1534, 0.0
      %v1785 = vmax.f32 %v1537, 0.0
      %v1786 = vmax.f32 %v1539, 0.0
      %v1787 = vmax.f32 %v1542, 0.0
      %v1788 = vmax.f32 %v1544, 0.0
      %v1789 = vmax.f32 %v1547, 0.0
      %v1790 = vmax.f32 %v1549, 0.0
      %v1791 = vmax.f32 %v1552, 0.0
      %v1792 = vmax.f32 %v1554, 0.0
      %v1793 = vmax.f32 %v1557, 0.0
      %v1794 = vmax.f32 %v1559, 0.0
      %v1795 = vmax.f32 %v1562, 0.0
      %v1796 = vmax.f32 %v1564, 0.0
      %v1797 = vmax.f32 %v1567, 0.0
      %v1798 = vmax.f32 %v1569, 0.0
      %v1799 = vmax.f32 %v1572, 0.0
      %v1800 = vmax.f32 %v1574, 0.0
      %v1801 = vmax.f32 %v1577, 0.0
      %v1802 = vmax.f32 %v1579, 0.0
      %v1803 = vmax.f32 %v1582, 0.0
      %v1804 = vmax.f32 %v1584, 0.0
      %v1805 = vmax.f32 %v1587, 0.0
      %v1806 = vmax.f32 %v1589, 0.0
      %v1807 = vmax.f32 %v1592, 0.0
      %v1808 = vmax.f32 %v1594, 0.0
      %v1809 = vmax.f32 %v1597, 0.0
      %v1810 = vmax.f32 %v1599, 0.0
      %v1811 = vmax.f32 %v1602, 0.0
      %v1812 = vmax.f32 %v1604, 0.0
      %v1813 = vmax.f32 %v1607, 0.0
      %v1814 = vmax.f32 %v1609, 0.0
      %v1815 = vmax.f32 %v1612, 0.0
      %v1816 = vmax.f32 %v1614, 0.0
      %v1817 = vmax.f32 %v1617, 0.0
      %v1818 = vmax.f32 %v1619, 0.0
      %v1819 = vmax.f32 %v1622, 0.0
      %v1820 = vmax.f32 %v1624, 0.0
      %v1821 = vmax.f32 %v1627, 0.0
      %v1822 = vmax.f32 %v1629, 0.0
      %v1823 = vadd.f32 %v1631, %v1632
      %v1824 = vadd.f32 %v1823, %v1633
      %v1825 = vadd.f32 %v1824, %v1634
      %v1826 = vadd.f32 %v1825, %v1635
      %v1827 = vadd.f32 %v1826, %v1636
      %v1828 = vadd.f32 %v1827, %v1637
      %v1829 = vadd.f32 %v1828, %v1638
      %v1830 = vadd.f32 %v1829, %v1639
      %v1831 = vadd.f32 %v1830, %v1640
      %v1832 = vadd.f32 %v1831, %v1641
      %v1833 = vadd.f32 %v1832, %v1642
      %v1834 = vadd.f32 %v1833, %v1643
      %v1835 = vadd.f32 %v1834, %v1644
      %v1836 = vadd.f32 %v1835, %v1645
      %v1837 = vadd.f32 %v1836, %v1646
      %v1838 = vadd.f32 %v1837, %v1647
      %v1839 = vadd.f32 %v1838, %v1648
      %v1840 = vadd.f32 %v1839, %v1649
      %v1841 = vadd.f32 %v1840, %v1650
      %v1842 = vadd.f32 %v1841, %v1651
      %v1843 = vadd.f32 %v1842, %v1652
      %v1844 = vadd.f32 %v1843, %v1653
      %v1845 = vadd.f32 %v1844, %v1654
      %v1846 = vadd.f32 %v1845, %v1655
      %v1847 = vadd.f32 %v1846, %v1656
      %v1848 = vadd.f32 %v1847, %v1657
      %v1849 = vadd.f32 %v1848, %v1658
      %v1850 = vadd.f32 %v1849, %v1659
      %v1851 = vadd.f32 %v1850, %v1660
      %v1852 = vadd.f32 %v1851, %v1661
      %v1853 = vadd.f32 %v1852, %v1662
      %v1854 = vrot.slane %v1853, 4
      %v1855 = vadd.f32 %v1853, %v1854
      %v1856 = vrot.slane %v1855, 2
      %v1857 = vadd.f32 %v1855, %v1856
      %v1858 = vrot.slane %v1857, 1
      %v1859 = vadd.f32 %v1857, %v1858
      %v1860 = vadd.f32 %v1663, %v1664
      %v1861 = vadd.f32 %v1860, %v1665
      %v1862 = vadd.f32 %v1861, %v1666
      %v1863 = vadd.f32 %v1862, %v1667
      %v1864 = vadd.f32 %v1863, %v1668
      %v1865 = vadd.f32 %v1864, %v1669
      %v1866 = vadd.f32 %v1865, %v1670
      %v1867 = vadd.f32 %v1866, %v1671
      %v1868 = vadd.f32 %v1867, %v1672
      %v1869 = vadd.f32 %v1868, %v1673
      %v1870 = vadd.f32 %v1869, %v1674
      %v1871 = vadd.f32 %v1870, %v1675
      %v1872 = vadd.f32 %v1871, %v1676
      %v1873 = vadd.f32 %v1872, %v1677
      %v1874 = vadd.f32 %v1873, %v1678
      %v1875 = vadd.f32 %v1874, %v1679
      %v1876 = vadd.f32 %v1875, %v1680
      %v1877 = vadd.f32 %v1876, %v1681
      %v1878 = vadd.f32 %v1877, %v1682
      %v1879 = vadd.f32 %v1878, %v1683
      %v1880 = vadd.f32 %v1879, %v1684
      %v1881 = vadd.f32 %v1880, %v1685
      %v1882 = vadd.f32 %v1881, %v1686
      %v1883 = vadd.f32 %v1882, %v1687
      %v1884 = vadd.f32 %v1883, %v1688
      %v1885 = vadd.f32 %v1884, %v1689
      %v1886 = vadd.f32 %v1885, %v1690
      %v1887 = vadd.f32 %v1886, %v1691
      %v1888 = vadd.f32 %v1887, %v1692
      %v1889 = vadd.f32 %v1888, %v1693
      %v1890 = vadd.f32 %v1889, %v1694
      %v1891 = vrot.slane %v1890, 4
      %v1892 = vadd.f32 %v1890, %v1891
      %v1893 = vrot.slane %v1892, 2
      %v1894 = vadd.f32 %v1892, %v1893
      %v1895 = vrot.slane %v1894, 1
      %v1896 = vadd.f32 %v1894, %v1895
      %v1897 = vadd.f32 %v1695, %v1696
      %v1898 = vadd.f32 %v1897, %v1697
      %v1899 = vadd.f32 %v1898, %v1698
      %v1900 = vadd.f32 %v1899, %v1699
      %v1901 = vadd.f32 %v1900, %v1700
      %v1902 = vadd.f32 %v1901, %v1701
      %v1903 = vadd.f32 %v1902, %v1702
      %v1904 = vadd.f32 %v1903, %v1703
      %v1905 = vadd.f32 %v1904, %v1704
      %v1906 = vadd.f32 %v1905, %v1705
      %v1907 = vadd.f32 %v1906, %v1706
      %v1908 = vadd.f32 %v1907, %v1707
      %v1909 = vadd.f32 %v1908, %v1708
      %v1910 = vadd.f32 %v1909, %v1709
      %v1911 = vadd.f32 %v1910, %v1710
      %v1912 = vadd.f32 %v1911, %v1711
      %v1913 = vadd.f32 %v1912, %v1712
      %v1914 = vadd.f32 %v1913, %v1713
      %v1915 = vadd.f32 %v1914, %v1714
      %v1916 = vadd.f32 %v1915, %v1715
      %v1917 = vadd.f32 %v1916, %v1716
      %v1918 = vadd.f32 %v1917, %v1717
      %v1919 = vadd.f32 %v1918, %v1718
      %v1920 = vadd.f32 %v1919, %v1719
      %v1921 = vadd.f32 %v1920, %v1720
      %v1922 = vadd.f32 %v1921, %v1721
      %v1923 = vadd.f32 %v1922, %v1722
      %v1924 = vadd.f32 %v1923, %v1723
      %v1925 = vadd.f32 %v1924, %v1724
      %v1926 = vadd.f32 %v1925, %v1725
      %v1927 = vadd.f32 %v1926, %v1726
      %v1928 = vrot.slane %v1927, 4
      %v1929 = vadd.f32 %v1927, %v1928
      %v1930 = vrot.slane %v1929, 2
      %v1931 = vadd.f32 %v1929, %v1930
      %v1932 = vrot.slane %v1931, 1
      %v1933 = vadd.f32 %v1931, %v1932
      %v1934 = vadd.f32 %v1727, %v1728
      %v1935 = vadd.f32 %v1934, %v1729
      %v1936 = vadd.f32 %v1935, %v1730
      %v1937 = vadd.f32 %v1936, %v1731
      %v1938 = vadd.f32 %v1937, %v1732
      %v1939 = vadd.f32 %v1938, %v1733
      %v1940 = vadd.f32 %v1939, %v1734
      %v1941 = vadd.f32 %v1940, %v1735
      %v1942 = vadd.f32 %v1941, %v1736
      %v1943 = vadd.f32 %v1942, %v1737
      %v1944 = vadd.f32 %v1943, %v1738
      %v1945 = vadd.f32 %v1944, %v1739
      %v1946 = vadd.f32 %v1945, %v1740
      %v1947 = vadd.f32 %v1946, %v1741
      %v1948 = vadd.f32 %v1947, %v1742
      %v1949 = vadd.f32 %v1948, %v1743
      %v1950 = vadd.f32 %v1949, %v1744
      %v1951 = vadd.f32 %v1950, %v1745
      %v1952 = vadd.f32 %v1951, %v1746
      %v1953 = vadd.f32 %v1952, %v1747
      %v1954 = vadd.f32 %v1953, %v1748
      %v1955 = vadd.f32 %v1954, %v1749
      %v1956 = vadd.f32 %v1955, %v1750
      %v1957 = vadd.f32 %v1956, %v1751
      %v1958 = vadd.f32 %v1957, %v1752
      %v1959 = vadd.f32 %v1958, %v1753
      %v1960 = vadd.f32 %v1959, %v1754
      %v1961 = vadd.f32 %v1960, %v1755
      %v1962 = vadd.f32 %v1961, %v1756
      %v1963 = vadd.f32 %v1962, %v1757
      %v1964 = vadd.f32 %v1963, %v1758
      %v1965 = vrot.slane %v1964, 4
      %v1966 = vadd.f32 %v1964, %v1965
      %v1967 = vrot.slane %v1966, 2
      %v1968 = vadd.f32 %v1966, %v1967
      %v1969 = vrot.slane %v1968, 1
      %v1970 = vadd.f32 %v1968, %v1969
      %v1971 = vadd.f32 %v1759, %v1760
      %v1972 = vadd.f32 %v1971, %v1761
      %v1973 = vadd.f32 %v1972, %v1762
      %v1974 = vadd.f32 %v1973, %v1763
      %v1975 = vadd.f32 %v1974, %v1764
      %v1976 = vadd.f32 %v1975, %v1765
      %v1977 = vadd.f32 %v1976, %v1766
      %v1978 = vadd.f32 %v1977, %v1767
      %v1979 = vadd.f32 %v1978, %v1768
      %v1980 = vadd.f32 %v1979, %v1769
      %v1981 = vadd.f32 %v1980, %v1770
      %v1982 = vadd.f32 %v1981, %v1771
      %v1983 = vadd.f32 %v1982, %v1772
      %v1984 = vadd.f32 %v1983, %v1773
      %v1985 = vadd.f32 %v1984, %v1774
      %v1986 = vadd.f32 %v1985, %v1775
      %v1987 = vadd.f32 %v1986, %v1776
      %v1988 = vadd.f32 %v1987, %v1777
      %v1989 = vadd.f32 %v1988, %v1778
      %v1990 = vadd.f32 %v1989, %v1779
      %v1991 = vadd.f32 %v1990, %v1780
      %v1992 = vadd.f32 %v1991, %v1781
      %v1993 = vadd.f32 %v1992, %v1782
      %v1994 = vadd.f32 %v1993, %v1783
      %v1995 = vadd.f32 %v1994, %v1784
      %v1996 = vadd.f32 %v1995, %v1785
      %v1997 = vadd.f32 %v1996, %v1786
      %v1998 = vadd.f32 %v1997, %v1787
      %v1999 = vadd.f32 %v1998, %v1788
      %v2000 = vadd.f32 %v1999, %v1789
      %v2001 = vadd.f32 %v2000, %v1790
      %v2002 = vrot.slane %v2001, 4
      %v2003 = vadd.f32 %v2001, %v2002
      %v2004 = vrot.slane %v2003, 2
      %v2005 = vadd.f32 %v2003, %v2004
      %v2006 = vrot.slane %v2005, 1
      %v2007 = vadd.f32 %v2005, %v2006
      %v2008 = vadd.f32 %v1791, %v1792
      %v2009 = vadd.f32 %v2008, %v1793
      %v2010 = vadd.f32 %v2009, %v1794
      %v2011 = vadd.f32 %v2010, %v1795
      %v2012 = vadd.f32 %v2011, %v1796
      %v2013 = vadd.f32 %v2012, %v1797
      %v2014 = vadd.f32 %v2013, %v1798
      %v2015 = vadd.f32 %v2014, %v1799
      %v2016 = vadd.f32 %v2015, %v1800
      %v2017 = vadd.f32 %v2016, %v1801
      %v2018 = vadd.f32 %v2017, %v1802
      %v2019 = vadd.f32 %v2018, %v1803
      %v2020 = vadd.f32 %v2019, %v1804
      %v2021 = vadd.f32 %v2020, %v1805
      %v2022 = vadd.f32 %v2021, %v1806
      %v2023 = vadd.f32 %v2022, %v1807
      %v2024 = vadd.f32 %v2023, %v1808
      %v2025 = vadd.f32 %v2024, %v1809
      %v2026 = vadd.f32 %v2025, %v1810
      %v2027 = vadd.f32 %v2026, %v1811
      %v2028 = vadd.f32 %v2027, %v1812
      %v2029 = vadd.f32 %v2028, %v1813
      %v2030 = vadd.f32 %v2029, %v1814
      %v2031 = vadd.f32 %v2030, %v1815
      %v2032 = vadd.f32 %v2031, %v1816
      %v2033 = vadd.f32 %v2032, %v1817
      %v2034 = vadd.f32 %v2033, %v1818
      %v2035 = vadd.f32 %v2034, %v1819
      %v2036 = vadd.f32 %v2035, %v1820
      %v2037 = vadd.f32 %v2036, %v1821
      %v2038 = vadd.f32 %v2037, %v1822
      %v2039 = vrot.slane %v2038, 4
      %v2040 = vadd.f32 %v2038, %v2039
      %v2041 = vrot.slane %v2040, 2
      %v2042 = vadd.f32 %v2040, %v2041
      %v2043 = vrot.slane %v2042, 1
      %v2044 = vadd.f32 %v2042, %v2043
      %v2045 = vrcp.pop 256.0
      %v2046 = vmul.f32 256.0, %v2045
      %v2047 = vsub.f32 1.0, %v2046
      %v2048 = vmul.f32 %v2045, %v2047
      %v2049 = vadd.f32 %v2045, %v2048
      %vm2050 = vweird.f32 %v2045
      %v2051 = vsel %vm2050, %v2045, %v2049
      %v2052 = vmul.f32 %v1859, %v2051
      %v2053 = vmul.f32 %v1896, %v2051
      %v2054 = vmul.f32 %v1933, %v2051
      %v2055 = vmul.f32 %v1970, %v2051
      %v2056 = vmul.f32 %v2007, %v2051
      %v2057 = vmul.f32 %v2044, %v2051
      %vm2064 = vcmask 1041409
      %v2065 = vsel %vm2064, %v2053, %v2052
      %vm2066 = vcmask 1042434
      %v2067 = vsel %vm2066, %v2054, %v2065
      %vm2068 = vcmask 1043459
      %v2069 = vsel %vm2068, %v2055, %v2067
      %vm2070 = vcmask 1044484
      %v2071 = vsel %vm2070, %v2056, %v2069
      %vm2072 = vcmask 1045509
      %v2073 = vsel %vm2072, %v2057, %v2071
      %2075 = vst [vmem:[%s170] sm:$0x3f] %v2073
      %p2076 = scmp.lt.s32.totalorder %s14, 1
      %s2077 = scalar_select %p2076, %s14, 1
      %s2078 = smul.addr %s2077, 8
      %s2079 = scalar_lea.vmem %s3, %s2078
      // Predicated region
      $region33: #{tpu_custom_call.1} parent=31 // pred_check
        %p2080 = pneg %p100
      $region34: #{tpu_custom_call.1} parent=31 // pred_check_branch
        %2082 = sbr.rel (%p2080) target = $region36
      $region35: #{tpu_custom_call.1} parent=31 // pred_region
        _
      $region36: #{tpu_custom_call.1} parent=31 // pred_fallthru
        _
    $region32: #{tpu_custom_call.1} parent=5 // pred_fallthru
      _
    %p2083 = scmp.le.s32.totalorder 2, %s9
    // Predicated region
    $region37: #{tpu_custom_call.1} parent=5 // pred_check
      %p2084 = pneg %p2083
    $region38: #{tpu_custom_call.1} parent=5 // pred_check_branch
      %2086 = sbr.rel (%p2084) target = $region40
    $region39: #{tpu_custom_call.1} parent=5 // pred_region
      %s2087 = ssub.s32 %s9, 2
      // Predicated region
      $region41: #{tpu_custom_call.1} parent=39 // pred_check
        %p2088 = pneg %p106
      $region42: #{tpu_custom_call.1} parent=39 // pred_check_branch
        %2090 = sbr.rel (%p2088) target = $region44
      $region43: #{tpu_custom_call.1} parent=39 // pred_region
        %p2091 = scmp.lt.s32.totalorder %s15, 1
        %s2092 = scalar_select %p2091, %s15, 1
        %s2093 = smul.addr %s2092, 8
        %s2094 = scalar_lea.vmem %s3, %s2093
      $region44: #{tpu_custom_call.1} parent=39 // pred_fallthru
        _
    $region40: #{tpu_custom_call.1} parent=5 // pred_fallthru
      _
  $region6: #{tpu_custom_call.1} parent=0 // loop_footer
    %s13 = sadd.s32 1, %s9
  $region7: #{tpu_custom_call.1} parent=0 // loop_footer_branch
    %8 = sbr.rel target = $region3
  $region8: #{tpu_custom_call.1} parent=0 // loop_exit
    _

</llo_original>
